<compile_context>
chip_gen: v6e
topology: v6e:2x2x1
jax: 0.10.0
libtpu: 0.0.40
codegen_flags: <defaults>
</compile_context>

<pallas_src>
import math

import jax
import jax.numpy as jnp
from jax import lax
from jax.experimental import pallas as pl
from jax.experimental.pallas import tpu as pltpu

# ---------------- model hyper-parameters (small, forward-consistent) ----------
D_MODEL = 32
D_STATE = 16
D_CONV = 4
EXPAND = 2
D_INNER = EXPAND * D_MODEL                 # 64
DT_RANK = math.ceil(D_MODEL / 16)          # 2
BATCH = 2
SEQ = 8
BL = BATCH * SEQ                           # batch folded into rows
LANES = 128                                # lane-dense padded width (= 2 * D_INNER)


def _softplus(x):
    # numerically stable softplus
    return jnp.maximum(x, 0.0) + jnp.log1p(jnp.exp(-jnp.abs(x)))


def _sigmoid(x):
    return jax.nn.sigmoid(x)


def _dot(a, b):
    # DEFAULT matmul precision: single bf16 MXU pass, f32 accumulation.
    return jnp.dot(a, b, preferred_element_type=jnp.float32)


# ------------------------------- Pallas kernel --------------------------------
def mamba_plus_kernel(
    x_ref,        # (BL, 128)    input, lanes 32: are zero-padded
    w_xf_ref,     # (128, 256)   fused [in_proj^T (128) | forget_gate^T (32) | 0]
    conv_w_ref,   # (D_CONV, 64) depthwise conv taps
    w_uf_ref,     # (64, 128)    fused [w_delta (64) | w_B^T (16) | w_C^T (16) | 0]
    a_neg2_ref,   # (16, 128)    -exp(A_log)^T tiled twice along lanes
    w_out_ref,    # (64, 128)    out_proj^T, lanes 32: zero-padded
    bias_ref,     # (4, 128)     rows: [conv_b | dt_bias | D | fg_bias], 0-padded
    o_ref,        # (BL, 128)    output, lanes 32: zero
):
    x = x_ref[...]                                          # (BL, 128)

    biases = bias_ref[...]
    conv_b = biases[0:1, :D_INNER]                          # (1, 64)
    b_dt   = biases[1:2, :D_INNER]
    d_prm  = biases[2:3, :D_INNER]
    b_fg   = biases[3:4, :]                                 # (1, 128), lanes 32: zero

    # ---- fused x-side projection: in_proj and forget-gate in ONE matmul ----
    xw = _dot(x, w_xf_ref[...])                             # (BL, 256)
    x_in   = xw[:, :D_INNER]                                # (BL, 64)
    z      = xw[:, D_INNER:2 * D_INNER]                     # (BL, 64)
    fg_pre = xw[:, 2 * D_INNER:]                            # (BL, 128), lanes 32: 0

    # ---- depthwise causal conv1d + SiLU on the full folded slab ----
    # acc[r] = b + sum_s w[K-1-s] * x_in[r-s]; rows whose tap crosses a batch
    # boundary (row-in-sequence < s) are masked to zero.
    conv_w = conv_w_ref[...]
    t_in = lax.broadcasted_iota(jnp.int32, (BL, D_INNER), 0) & (SEQ - 1)
    acc = conv_b + x_in * conv_w[D_CONV - 1:D_CONV, :]
    for s in range(1, D_CONV):                              # static 3-tap unroll
        shifted = jnp.concatenate(
            [jnp.zeros((s, D_INNER), jnp.float32), x_in[:BL - s, :]], axis=0)
        shifted = jnp.where(t_in >= s, shifted, 0.0)
        acc = acc + shifted * conv_w[D_CONV - 1 - s:D_CONV - s, :]
    u = acc * _sigmoid(acc)                                 # SiLU, (BL, 64)

    # ---- fused u-side projection: delta / B / C in ONE matmul ----
    uw = _dot(u, w_uf_ref[...])                             # (BL, 128)
    delta = _softplus(uw[:, :D_INNER] + b_dt)               # (BL, 64)
    Bm = uw[:, D_INNER:D_INNER + D_STATE]                   # (BL, 16)
    Cm = uw[:, D_INNER + D_STATE:D_INNER + 2 * D_STATE]     # (BL, 16)
    du = delta * u

    # ---- selective scan: batch packed along lanes (0:64 = batch0, 64:128 = batch1) ----
    delta_p = jnp.concatenate([delta[:SEQ], delta[SEQ:]], axis=1)   # (SEQ, 128)
    du_p    = jnp.concatenate([du[:SEQ],    du[SEQ:]],    axis=1)   # (SEQ, 128)

    # ONE lane-dense exp over the whole dA slab (EUP was the binding unit before)
    dA = jnp.exp(delta_p[:, None, :] * a_neg2_ref[...][None, :, :])  # (SEQ, 16, 128)

    def pack_state_coef(m):          # (BL, d_state) -> (SEQ, d_state, 128)
        return jnp.concatenate(
            [jnp.broadcast_to(m[:SEQ, :, None], (SEQ, D_STATE, D_INNER)),
             jnp.broadcast_to(m[SEQ:, :, None], (SEQ, D_STATE, D_INNER))], axis=2)

    Bc = pack_state_coef(Bm)
    Cc = pack_state_coef(Cm)
    dBu = Bc * du_p[:, None, :]                              # (SEQ, 16, 128)

    # single 128-lane recurrence chain; C-contraction + write row folded per step
    # (off the serial multiply-add chain) so no stack of h states stays live.
    h = jnp.zeros((D_STATE, 2 * D_INNER), jnp.float32)
    y_rows = []
    for t in range(SEQ):                                     # static unroll
        h = dA[t] * h + dBu[t]
        y_rows.append(jnp.sum(Cc[t] * h, axis=0, keepdims=True))   # (1, 128)
    y_p = jnp.concatenate(y_rows, axis=0)                    # (SEQ, 128)

    # unpack lanes -> batch-major rows and add the D skip connection
    y_ssm = jnp.concatenate([y_p[:, :D_INNER], y_p[:, D_INNER:]], axis=0) + d_prm * u

    # ---- output gate, out_proj (lane-dense padded), forget-gate blend ----
    y = y_ssm * (z * _sigmoid(z))                            # (BL, 64)
    mamba_out = _dot(y, w_out_ref[...])                      # (BL, 128), lanes 32: 0
    fg = _sigmoid(fg_pre + b_fg)                             # lanes 32: = 0.5, harmless
    # lanes 32: of x and mamba_out are zero -> output lanes 32: are exactly zero
    o_ref[...] = fg * x + (1.0 - fg) * mamba_out             # lane-dense (BL, 128) store


PARAM_ORDER = ["w_xf", "conv_w_t", "w_uf", "a_neg2", "w_out_wide", "bias4"]


def mamba_plus(x, params):
    B, L, D = x.shape
    if (B, L, D) != (BATCH, SEQ, D_MODEL):
        raise ValueError(
            f"kernel is specialized to (B, L, D)=({BATCH}, {SEQ}, {D_MODEL}); got {x.shape}")
    weights = [params[k] for k in PARAM_ORDER]

    # Batch folded into rows; input zero-padded to 128 lanes (layout plumbing in
    # the wrapper) so the kernel's output store is a lane-dense (BL, 128) slab.
    x2 = jnp.pad(x.reshape(B * L, D).astype(jnp.float32), ((0, 0), (0, LANES - D)))

    vmem = pl.BlockSpec(memory_space=pltpu.MemorySpace.VMEM)
    out_wide = pl.pallas_call(
        mamba_plus_kernel,
        out_shape=jax.ShapeDtypeStruct((B * L, LANES), jnp.float32),
        in_specs=[vmem] * (1 + len(weights)),
        out_specs=vmem,
    )(x2, *weights)
    return out_wide[:, :D].reshape(B, L, D)


# ------------------------- deterministic parameter init ------------------------
def init_params(key):
    ks = jax.random.split(key, 9)
    s = 0.1
    w_in    = jax.random.normal(ks[0], (2 * D_INNER, D_MODEL), jnp.float32) * s
    conv_w  = jax.random.normal(ks[1], (D_INNER, D_CONV), jnp.float32) * s
    conv_b  = jax.random.normal(ks[2], (D_INNER,), jnp.float32) * s
    w_xproj = jax.random.normal(ks[3], (DT_RANK + 2 * D_STATE, D_INNER), jnp.float32) * s
    w_dt    = jax.random.normal(ks[4], (D_INNER, DT_RANK), jnp.float32) * s
    b_dt    = jax.random.normal(ks[5], (D_INNER,), jnp.float32) * s
    # Mamba's canonical S4D-real init for A and D
    a_log   = jnp.log(jnp.tile(jnp.arange(1, D_STATE + 1, dtype=jnp.float32)[None, :],
                               (D_INNER, 1)))                 # (d_inner, d_state)
    d_param = jnp.ones((D_INNER,), jnp.float32)
    w_out   = jax.random.normal(ks[6], (D_MODEL, D_INNER), jnp.float32) * s
    w_fg    = jax.random.normal(ks[7], (D_MODEL, D_MODEL), jnp.float32) * s
    b_fg    = jax.random.normal(ks[8], (D_MODEL,), jnp.float32) * s

    # ---- derived, kernel-friendly layouts (pure weight transforms, done once) ----
    # fused x-side weight: [in_proj^T (128) | forget_gate^T (32) | zero-pad (96)],
    # rows padded to 128 to match the lane-padded x.
    w_xf = jnp.zeros((LANES, 2 * LANES), jnp.float32)
    w_xf = w_xf.at[:D_MODEL, :2 * D_INNER].set(w_in.T)
    w_xf = w_xf.at[:D_MODEL, 2 * D_INNER:2 * D_INNER + D_MODEL].set(w_fg.T)

    # fold the dt_rank=2 bottleneck into one 64x64 weight
    w_delta = w_xproj[:DT_RANK, :].T @ w_dt.T                 # (d_inner, d_inner)
    # fused u-side weight: [w_delta (64) | w_B^T (16) | w_C^T (16) | zero-pad (32)]
    w_uf = jnp.zeros((D_INNER, LANES), jnp.float32)
    w_uf = w_uf.at[:, :D_INNER].set(w_delta)
    w_uf = w_uf.at[:, D_INNER:D_INNER + 2 * D_STATE].set(w_xproj[DT_RANK:, :].T)

    # A = -exp(A_log); pass A^T tiled twice along lanes for the batch-lane-packed scan
    a_neg2 = jnp.tile(-jnp.exp(a_log).T, (1, 2))              # (d_state, 128)

    # out_proj^T padded to 128 output lanes (lane-dense output store)
    w_out_wide = jnp.zeros((D_INNER, LANES), jnp.float32).at[:, :D_MODEL].set(w_out.T)

    # one bias per sublane row, every slice starts at lane 0
    bias4 = jnp.zeros((4, LANES), jnp.float32)
    bias4 = bias4.at[0, :D_INNER].set(conv_b)
    bias4 = bias4.at[1, :D_INNER].set(b_dt)
    bias4 = bias4.at[2, :D_INNER].set(d_param)
    bias4 = bias4.at[3, :D_MODEL].set(b_fg)

    return dict(
        w_xf=w_xf,
        conv_w_t=conv_w.T,            # (d_conv, d_inner)
        w_uf=w_uf,
        a_neg2=a_neg2,
        w_out_wide=w_out_wide,
        bias4=bias4,
    )


# ------------------------------ pure-JAX reference -----------------------------
def mamba_plus_ref(x, p):
    # Reads the SAME fused / transposed weights the kernel consumes, and uses the
    # same DEFAULT matmul precision, but runs straightforward per-batch JAX.
    w_in_t   = p["w_xf"][:D_MODEL, :2 * D_INNER]
    w_fg_t   = p["w_xf"][:D_MODEL, 2 * D_INNER:2 * D_INNER + D_MODEL]
    conv_w_t = p["conv_w_t"]
    w_delta  = p["w_uf"][:, :D_INNER]
    w_bc_t   = p["w_uf"][:, D_INNER:D_INNER + 2 * D_STATE]
    a_neg_t  = p["a_neg2"][:, :D_INNER]                       # (d_state, d_inner)
    w_out_t  = p["w_out_wide"][:, :D_MODEL]
    conv_b = p["bias4"][0, :D_INNER]
    b_dt   = p["bias4"][1, :D_INNER]
    d_prm  = p["bias4"][2, :D_INNER]
    b_fg   = p["bias4"][3, :D_MODEL]

    def one(xb):                                              # (L, d_model)
        xz = _dot(xb, w_in_t)
        x_in, z = xz[:, :D_INNER], xz[:, D_INNER:]
        xpad = jnp.concatenate(
            [jnp.zeros((D_CONV - 1, D_INNER), jnp.float32), x_in], axis=0)
        acc = jnp.zeros((SEQ, D_INNER), jnp.float32) + conv_b[None, :]
        for k in range(D_CONV):
            acc = acc + xpad[k:k + SEQ] * conv_w_t[k:k + 1, :]
        u = acc * _sigmoid(acc)
        delta = _softplus(_dot(u, w_delta) + b_dt[None, :])
        bc = _dot(u, w_bc_t)                                  # (L, 2*d_state)
        Bm, Cm = bc[:, :D_STATE], bc[:, D_STATE:]
        h = jnp.zeros((D_STATE, D_INNER), jnp.float32)
        ys = []
        for t in range(SEQ):
            h = jnp.exp(delta[t:t + 1] * a_neg_t) * h \
                + Bm[t][:, None] * (delta[t:t + 1] * u[t:t + 1])
            ys.append(jnp.sum(Cm[t][:, None] * h, axis=0) + d_prm * u[t])
        y = jnp.stack(ys) * (z * _sigmoid(z))
        mo = _dot(y, w_out_t)
        fg = _sigmoid(_dot(xb, w_fg_t) + b_fg[None, :])
        return fg * xb + (1.0 - fg) * mo

    return jax.vmap(one)(x)


if __name__ == "__main__":
    key = jax.random.PRNGKey(0)
    kx, kp = jax.random.split(key)
    x = jax.random.normal(kx, (BATCH, SEQ, D_MODEL), jnp.float32)
    params = init_params(kp)

    out = jax.block_until_ready(mamba_plus(x, params))
    ref = jax.block_until_ready(mamba_plus_ref(x, params))

    assert out.shape == (BATCH, SEQ, D_MODEL)
    err = float(jnp.max(jnp.abs(out - ref)))
    assert jnp.allclose(out, ref, rtol=5e-3, atol=5e-3), f"max abs diff {err}"
    print("KERNEL_OK")
</pallas_src>

<mosaic_0001>
module attributes {stable_mosaic.version = 11 : i64} {
  func.func @mamba_plus_kernel(%arg0: memref<16x128xf32, #tpu.memory_space<vmem>>, %arg1: memref<128x256xf32, #tpu.memory_space<vmem>>, %arg2: memref<4x64xf32, #tpu.memory_space<vmem>>, %arg3: memref<64x128xf32, #tpu.memory_space<vmem>>, %arg4: memref<16x128xf32, #tpu.memory_space<vmem>>, %arg5: memref<64x128xf32, #tpu.memory_space<vmem>>, %arg6: memref<4x128xf32, #tpu.memory_space<vmem>>, %arg7: memref<16x128xf32, #tpu.memory_space<vmem>>) attributes {dimension_semantics = [], scalar_prefetch = 0 : i64, scratch_operands = 0 : i64, tpu.core_type = #tpu.core_type<tc>} {
    %c0 = arith.constant 0 : index
    %c0_0 = arith.constant 0 : index
    %0 = vector.load %arg0[%c0, %c0_0] : memref<16x128xf32, #tpu.memory_space<vmem>>, vector<16x128xf32>
    %c0_1 = arith.constant 0 : index
    %c0_2 = arith.constant 0 : index
    %1 = vector.load %arg6[%c0_1, %c0_2] : memref<4x128xf32, #tpu.memory_space<vmem>>, vector<4x128xf32>
    %2 = vector.extract_strided_slice %1 {offsets = [0, 0], sizes = [1, 64], strides = [1, 1]} : vector<4x128xf32> to vector<1x64xf32>
    %3 = vector.extract_strided_slice %1 {offsets = [1, 0], sizes = [1, 64], strides = [1, 1]} : vector<4x128xf32> to vector<1x64xf32>
    %4 = vector.extract_strided_slice %1 {offsets = [2, 0], sizes = [1, 64], strides = [1, 1]} : vector<4x128xf32> to vector<1x64xf32>
    %5 = vector.extract_strided_slice %1 {offsets = [3, 0], sizes = [1, 128], strides = [1, 1]} : vector<4x128xf32> to vector<1x128xf32>
    %c0_3 = arith.constant 0 : index
    %c0_4 = arith.constant 0 : index
    %6 = vector.load %arg1[%c0_3, %c0_4] : memref<128x256xf32, #tpu.memory_space<vmem>>, vector<128x256xf32>
    %cst = arith.constant dense<0.000000e+00> : vector<16x256xf32>
    %7 = tpu.matmul %0, %6, %cst {dimension_numbers = #tpu.dot_dimension_numbers<[1], [0], [0], [1], [0, 0, 1, 1], [], []>} : vector<16x128xf32>, vector<128x256xf32>, vector<16x256xf32> -> vector<16x256xf32>
    %8 = vector.extract_strided_slice %7 {offsets = [0, 0], sizes = [16, 64], strides = [1, 1]} : vector<16x256xf32> to vector<16x64xf32>
    %9 = vector.extract_strided_slice %7 {offsets = [0, 64], sizes = [16, 64], strides = [1, 1]} : vector<16x256xf32> to vector<16x64xf32>
    %10 = vector.extract_strided_slice %7 {offsets = [0, 128], sizes = [16, 128], strides = [1, 1]} : vector<16x256xf32> to vector<16x128xf32>
    %c0_5 = arith.constant 0 : index
    %c0_6 = arith.constant 0 : index
    %11 = vector.load %arg2[%c0_5, %c0_6] : memref<4x64xf32, #tpu.memory_space<vmem>>, vector<4x64xf32>
    %12 = tpu.iota {dimensions = array<i32: 0>} : vector<16x64xi32>
    %c7_i32 = arith.constant 7 : i32
    %13 = vector.broadcast %c7_i32 : i32 to vector<16x64xi32>
    %14 = arith.andi %12, %13 : vector<16x64xi32>
    %15 = vector.extract_strided_slice %11 {offsets = [3, 0], sizes = [1, 64], strides = [1, 1]} : vector<4x64xf32> to vector<1x64xf32>
    %16 = vector.broadcast %15 : vector<1x64xf32> to vector<16x64xf32>
    %17 = arith.mulf %8, %16 : vector<16x64xf32>
    %18 = vector.broadcast %2 : vector<1x64xf32> to vector<16x64xf32>
    %19 = arith.addf %18, %17 : vector<16x64xf32>
    %cst_7 = arith.constant 0.000000e+00 : f32
    %20 = vector.broadcast %cst_7 : f32 to vector<1x64xf32>
    %21 = vector.extract_strided_slice %8 {offsets = [0, 0], sizes = [15, 64], strides = [1, 1]} : vector<16x64xf32> to vector<15x64xf32>
    %22 = tpu.concatenate %20, %21 in 0 : vector<1x64xf32>, vector<15x64xf32> -> vector<16x64xf32>
    %c1_i32 = arith.constant 1 : i32
    %23 = vector.broadcast %c1_i32 : i32 to vector<16x64xi32>
    %24 = arith.cmpi sge, %14, %23 : vector<16x64xi32>
    %cst_8 = arith.constant 0.000000e+00 : f32
    %25 = vector.broadcast %cst_8 : f32 to vector<16x64xf32>
    %26 = arith.select %24, %22, %25 : vector<16x64xi1>, vector<16x64xf32>
    %27 = vector.extract_strided_slice %11 {offsets = [2, 0], sizes = [1, 64], strides = [1, 1]} : vector<4x64xf32> to vector<1x64xf32>
    %28 = vector.broadcast %27 : vector<1x64xf32> to vector<16x64xf32>
    %29 = arith.mulf %26, %28 : vector<16x64xf32>
    %30 = arith.addf %19, %29 : vector<16x64xf32>
    %cst_9 = arith.constant 0.000000e+00 : f32
    %31 = vector.broadcast %cst_9 : f32 to vector<2x64xf32>
    %32 = vector.extract_strided_slice %8 {offsets = [0, 0], sizes = [14, 64], strides = [1, 1]} : vector<16x64xf32> to vector<14x64xf32>
    %33 = tpu.concatenate %31, %32 in 0 : vector<2x64xf32>, vector<14x64xf32> -> vector<16x64xf32>
    %c2_i32 = arith.constant 2 : i32
    %34 = vector.broadcast %c2_i32 : i32 to vector<16x64xi32>
    %35 = arith.cmpi sge, %14, %34 : vector<16x64xi32>
    %cst_10 = arith.constant 0.000000e+00 : f32
    %36 = vector.broadcast %cst_10 : f32 to vector<16x64xf32>
    %37 = arith.select %35, %33, %36 : vector<16x64xi1>, vector<16x64xf32>
    %38 = vector.extract_strided_slice %11 {offsets = [1, 0], sizes = [1, 64], strides = [1, 1]} : vector<4x64xf32> to vector<1x64xf32>
    %39 = vector.broadcast %38 : vector<1x64xf32> to vector<16x64xf32>
    %40 = arith.mulf %37, %39 : vector<16x64xf32>
    %41 = arith.addf %30, %40 : vector<16x64xf32>
    %cst_11 = arith.constant 0.000000e+00 : f32
    %42 = vector.broadcast %cst_11 : f32 to vector<3x64xf32>
    %43 = vector.extract_strided_slice %8 {offsets = [0, 0], sizes = [13, 64], strides = [1, 1]} : vector<16x64xf32> to vector<13x64xf32>
    %44 = tpu.concatenate %42, %43 in 0 : vector<3x64xf32>, vector<13x64xf32> -> vector<16x64xf32>
    %c3_i32 = arith.constant 3 : i32
    %45 = vector.broadcast %c3_i32 : i32 to vector<16x64xi32>
    %46 = arith.cmpi sge, %14, %45 : vector<16x64xi32>
    %cst_12 = arith.constant 0.000000e+00 : f32
    %47 = vector.broadcast %cst_12 : f32 to vector<16x64xf32>
    %48 = arith.select %46, %44, %47 : vector<16x64xi1>, vector<16x64xf32>
    %49 = vector.extract_strided_slice %11 {offsets = [0, 0], sizes = [1, 64], strides = [1, 1]} : vector<4x64xf32> to vector<1x64xf32>
    %50 = vector.broadcast %49 : vector<1x64xf32> to vector<16x64xf32>
    %51 = arith.mulf %48, %50 : vector<16x64xf32>
    %52 = arith.addf %41, %51 : vector<16x64xf32>
    %53 = arith.negf %52 : vector<16x64xf32>
    %54 = math.exp %53 : vector<16x64xf32>
    %cst_13 = arith.constant 1.000000e+00 : f32
    %55 = vector.broadcast %cst_13 : f32 to vector<16x64xf32>
    %56 = arith.addf %55, %54 : vector<16x64xf32>
    %57 = arith.divf %55, %56 : vector<16x64xf32>
    %58 = arith.mulf %52, %57 : vector<16x64xf32>
    %c0_14 = arith.constant 0 : index
    %c0_15 = arith.constant 0 : index
    %59 = vector.load %arg3[%c0_14, %c0_15] : memref<64x128xf32, #tpu.memory_space<vmem>>, vector<64x128xf32>
    %cst_16 = arith.constant dense<0.000000e+00> : vector<16x128xf32>
    %60 = tpu.matmul %58, %59, %cst_16 {dimension_numbers = #tpu.dot_dimension_numbers<[1], [0], [0], [1], [0, 0, 1, 1], [], []>} : vector<16x64xf32>, vector<64x128xf32>, vector<16x128xf32> -> vector<16x128xf32>
    %61 = vector.extract_strided_slice %60 {offsets = [0, 0], sizes = [16, 64], strides = [1, 1]} : vector<16x128xf32> to vector<16x64xf32>
    %62 = vector.broadcast %3 : vector<1x64xf32> to vector<16x64xf32>
    %63 = arith.addf %61, %62 : vector<16x64xf32>
    %cst_17 = arith.constant 0.000000e+00 : f32
    %64 = vector.broadcast %cst_17 : f32 to vector<16x64xf32>
    %65 = arith.maximumf %63, %64 : vector<16x64xf32>
    %66 = math.absf %63 : vector<16x64xf32>
    %cst_18 = arith.constant 0.000000e+00 : f32
    %67 = vector.broadcast %cst_18 : f32 to vector<16x64xf32>
    %68 = arith.subf %67, %66 : vector<16x64xf32>
    %69 = math.exp %68 : vector<16x64xf32>
    %70 = math.log1p %69 : vector<16x64xf32>
    %71 = arith.addf %65, %70 : vector<16x64xf32>
    %72 = vector.extract_strided_slice %60 {offsets = [0, 64], sizes = [16, 16], strides = [1, 1]} : vector<16x128xf32> to vector<16x16xf32>
    %73 = vector.extract_strided_slice %60 {offsets = [0, 80], sizes = [16, 16], strides = [1, 1]} : vector<16x128xf32> to vector<16x16xf32>
    %74 = arith.mulf %71, %58 : vector<16x64xf32>
    %75 = vector.extract_strided_slice %71 {offsets = [0, 0], sizes = [8, 64], strides = [1, 1]} : vector<16x64xf32> to vector<8x64xf32>
    %76 = vector.extract_strided_slice %71 {offsets = [8, 0], sizes = [8, 64], strides = [1, 1]} : vector<16x64xf32> to vector<8x64xf32>
    %77 = tpu.concatenate %75, %76 in 1 : vector<8x64xf32>, vector<8x64xf32> -> vector<8x128xf32>
    %78 = vector.extract_strided_slice %74 {offsets = [0, 0], sizes = [8, 64], strides = [1, 1]} : vector<16x64xf32> to vector<8x64xf32>
    %79 = vector.extract_strided_slice %74 {offsets = [8, 0], sizes = [8, 64], strides = [1, 1]} : vector<16x64xf32> to vector<8x64xf32>
    %80 = tpu.concatenate %78, %79 in 1 : vector<8x64xf32>, vector<8x64xf32> -> vector<8x128xf32>
    %81 = vector.shape_cast %77 : vector<8x128xf32> to vector<8x1x128xf32>
    %c0_19 = arith.constant 0 : index
    %c0_20 = arith.constant 0 : index
    %82 = vector.load %arg4[%c0_19, %c0_20] : memref<16x128xf32, #tpu.memory_space<vmem>>, vector<16x128xf32>
    %83 = vector.shape_cast %82 : vector<16x128xf32> to vector<1x16x128xf32>
    %84 = vector.broadcast %81 : vector<8x1x128xf32> to vector<8x16x128xf32>
    %85 = vector.broadcast %83 : vector<1x16x128xf32> to vector<8x16x128xf32>
    %86 = arith.mulf %84, %85 : vector<8x16x128xf32>
    %87 = math.exp %86 : vector<8x16x128xf32>
    %88 = vector.extract_strided_slice %72 {offsets = [0, 0], sizes = [8, 16], strides = [1, 1]} : vector<16x16xf32> to vector<8x16xf32>
    %89 = vector.shape_cast %88 : vector<8x16xf32> to vector<8x16x1xf32>
    %90 = vector.shape_cast %89 : vector<8x16x1xf32> to vector<8x16x1xf32>
    %91 = vector.broadcast %90 : vector<8x16x1xf32> to vector<8x16x64xf32>
    %92 = vector.extract_strided_slice %72 {offsets = [8, 0], sizes = [8, 16], strides = [1, 1]} : vector<16x16xf32> to vector<8x16xf32>
    %93 = vector.shape_cast %92 : vector<8x16xf32> to vector<8x16x1xf32>
    %94 = vector.shape_cast %93 : vector<8x16x1xf32> to vector<8x16x1xf32>
    %95 = vector.broadcast %94 : vector<8x16x1xf32> to vector<8x16x64xf32>
    %96 = tpu.concatenate %91, %95 in 2 : vector<8x16x64xf32>, vector<8x16x64xf32> -> vector<8x16x128xf32>
    %97 = vector.extract_strided_slice %73 {offsets = [0, 0], sizes = [8, 16], strides = [1, 1]} : vector<16x16xf32> to vector<8x16xf32>
    %98 = vector.shape_cast %97 : vector<8x16xf32> to vector<8x16x1xf32>
    %99 = vector.shape_cast %98 : vector<8x16x1xf32> to vector<8x16x1xf32>
    %100 = vector.broadcast %99 : vector<8x16x1xf32> to vector<8x16x64xf32>
    %101 = vector.extract_strided_slice %73 {offsets = [8, 0], sizes = [8, 16], strides = [1, 1]} : vector<16x16xf32> to vector<8x16xf32>
    %102 = vector.shape_cast %101 : vector<8x16xf32> to vector<8x16x1xf32>
    %103 = vector.shape_cast %102 : vector<8x16x1xf32> to vector<8x16x1xf32>
    %104 = vector.broadcast %103 : vector<8x16x1xf32> to vector<8x16x64xf32>
    %105 = tpu.concatenate %100, %104 in 2 : vector<8x16x64xf32>, vector<8x16x64xf32> -> vector<8x16x128xf32>
    %106 = vector.shape_cast %80 : vector<8x128xf32> to vector<8x1x128xf32>
    %107 = vector.broadcast %106 : vector<8x1x128xf32> to vector<8x16x128xf32>
    %108 = arith.mulf %96, %107 : vector<8x16x128xf32>
    %cst_21 = arith.constant 0.000000e+00 : f32
    %109 = vector.broadcast %cst_21 : f32 to vector<16x128xf32>
    %110 = vector.extract_strided_slice %87 {offsets = [0, 0, 0], sizes = [1, 16, 128], strides = [1, 1, 1]} : vector<8x16x128xf32> to vector<1x16x128xf32>
    %111 = vector.shape_cast %110 : vector<1x16x128xf32> to vector<16x128xf32>
    %112 = arith.mulf %111, %109 : vector<16x128xf32>
    %113 = vector.extract_strided_slice %108 {offsets = [0, 0, 0], sizes = [1, 16, 128], strides = [1, 1, 1]} : vector<8x16x128xf32> to vector<1x16x128xf32>
    %114 = vector.shape_cast %113 : vector<1x16x128xf32> to vector<16x128xf32>
    %115 = arith.addf %112, %114 : vector<16x128xf32>
    %116 = vector.extract_strided_slice %105 {offsets = [0, 0, 0], sizes = [1, 16, 128], strides = [1, 1, 1]} : vector<8x16x128xf32> to vector<1x16x128xf32>
    %117 = vector.shape_cast %116 : vector<1x16x128xf32> to vector<16x128xf32>
    %118 = arith.mulf %117, %115 : vector<16x128xf32>
    %cst_22 = arith.constant dense<0.000000e+00> : vector<128xf32>
    %119 = vector.multi_reduction <add>, %118, %cst_22 [0] : vector<16x128xf32> to vector<128xf32>
    %120 = vector.shape_cast %119 : vector<128xf32> to vector<1x128xf32>
    %121 = vector.extract_strided_slice %87 {offsets = [1, 0, 0], sizes = [1, 16, 128], strides = [1, 1, 1]} : vector<8x16x128xf32> to vector<1x16x128xf32>
    %122 = vector.shape_cast %121 : vector<1x16x128xf32> to vector<16x128xf32>
    %123 = arith.mulf %122, %115 : vector<16x128xf32>
    %124 = vector.extract_strided_slice %108 {offsets = [1, 0, 0], sizes = [1, 16, 128], strides = [1, 1, 1]} : vector<8x16x128xf32> to vector<1x16x128xf32>
    %125 = vector.shape_cast %124 : vector<1x16x128xf32> to vector<16x128xf32>
    %126 = arith.addf %123, %125 : vector<16x128xf32>
    %127 = vector.extract_strided_slice %105 {offsets = [1, 0, 0], sizes = [1, 16, 128], strides = [1, 1, 1]} : vector<8x16x128xf32> to vector<1x16x128xf32>
    %128 = vector.shape_cast %127 : vector<1x16x128xf32> to vector<16x128xf32>
    %129 = arith.mulf %128, %126 : vector<16x128xf32>
    %cst_23 = arith.constant dense<0.000000e+00> : vector<128xf32>
    %130 = vector.multi_reduction <add>, %129, %cst_23 [0] : vector<16x128xf32> to vector<128xf32>
    %131 = vector.shape_cast %130 : vector<128xf32> to vector<1x128xf32>
    %132 = vector.extract_strided_slice %87 {offsets = [2, 0, 0], sizes = [1, 16, 128], strides = [1, 1, 1]} : vector<8x16x128xf32> to vector<1x16x128xf32>
    %133 = vector.shape_cast %132 : vector<1x16x128xf32> to vector<16x128xf32>
    %134 = arith.mulf %133, %126 : vector<16x128xf32>
    %135 = vector.extract_strided_slice %108 {offsets = [2, 0, 0], sizes = [1, 16, 128], strides = [1, 1, 1]} : vector<8x16x128xf32> to vector<1x16x128xf32>
    %136 = vector.shape_cast %135 : vector<1x16x128xf32> to vector<16x128xf32>
    %137 = arith.addf %134, %136 : vector<16x128xf32>
    %138 = vector.extract_strided_slice %105 {offsets = [2, 0, 0], sizes = [1, 16, 128], strides = [1, 1, 1]} : vector<8x16x128xf32> to vector<1x16x128xf32>
    %139 = vector.shape_cast %138 : vector<1x16x128xf32> to vector<16x128xf32>
    %140 = arith.mulf %139, %137 : vector<16x128xf32>
    %cst_24 = arith.constant dense<0.000000e+00> : vector<128xf32>
    %141 = vector.multi_reduction <add>, %140, %cst_24 [0] : vector<16x128xf32> to vector<128xf32>
    %142 = vector.shape_cast %141 : vector<128xf32> to vector<1x128xf32>
    %143 = vector.extract_strided_slice %87 {offsets = [3, 0, 0], sizes = [1, 16, 128], strides = [1, 1, 1]} : vector<8x16x128xf32> to vector<1x16x128xf32>
    %144 = vector.shape_cast %143 : vector<1x16x128xf32> to vector<16x128xf32>
    %145 = arith.mulf %144, %137 : vector<16x128xf32>
    %146 = vector.extract_strided_slice %108 {offsets = [3, 0, 0], sizes = [1, 16, 128], strides = [1, 1, 1]} : vector<8x16x128xf32> to vector<1x16x128xf32>
    %147 = vector.shape_cast %146 : vector<1x16x128xf32> to vector<16x128xf32>
    %148 = arith.addf %145, %147 : vector<16x128xf32>
    %149 = vector.extract_strided_slice %105 {offsets = [3, 0, 0], sizes = [1, 16, 128], strides = [1, 1, 1]} : vector<8x16x128xf32> to vector<1x16x128xf32>
    %150 = vector.shape_cast %149 : vector<1x16x128xf32> to vector<16x128xf32>
    %151 = arith.mulf %150, %148 : vector<16x128xf32>
    %cst_25 = arith.constant dense<0.000000e+00> : vector<128xf32>
    %152 = vector.multi_reduction <add>, %151, %cst_25 [0] : vector<16x128xf32> to vector<128xf32>
    %153 = vector.shape_cast %152 : vector<128xf32> to vector<1x128xf32>
    %154 = vector.extract_strided_slice %87 {offsets = [4, 0, 0], sizes = [1, 16, 128], strides = [1, 1, 1]} : vector<8x16x128xf32> to vector<1x16x128xf32>
    %155 = vector.shape_cast %154 : vector<1x16x128xf32> to vector<16x128xf32>
    %156 = arith.mulf %155, %148 : vector<16x128xf32>
    %157 = vector.extract_strided_slice %108 {offsets = [4, 0, 0], sizes = [1, 16, 128], strides = [1, 1, 1]} : vector<8x16x128xf32> to vector<1x16x128xf32>
    %158 = vector.shape_cast %157 : vector<1x16x128xf32> to vector<16x128xf32>
    %159 = arith.addf %156, %158 : vector<16x128xf32>
    %160 = vector.extract_strided_slice %105 {offsets = [4, 0, 0], sizes = [1, 16, 128], strides = [1, 1, 1]} : vector<8x16x128xf32> to vector<1x16x128xf32>
    %161 = vector.shape_cast %160 : vector<1x16x128xf32> to vector<16x128xf32>
    %162 = arith.mulf %161, %159 : vector<16x128xf32>
    %cst_26 = arith.constant dense<0.000000e+00> : vector<128xf32>
    %163 = vector.multi_reduction <add>, %162, %cst_26 [0] : vector<16x128xf32> to vector<128xf32>
    %164 = vector.shape_cast %163 : vector<128xf32> to vector<1x128xf32>
    %165 = vector.extract_strided_slice %87 {offsets = [5, 0, 0], sizes = [1, 16, 128], strides = [1, 1, 1]} : vector<8x16x128xf32> to vector<1x16x128xf32>
    %166 = vector.shape_cast %165 : vector<1x16x128xf32> to vector<16x128xf32>
    %167 = arith.mulf %166, %159 : vector<16x128xf32>
    %168 = vector.extract_strided_slice %108 {offsets = [5, 0, 0], sizes = [1, 16, 128], strides = [1, 1, 1]} : vector<8x16x128xf32> to vector<1x16x128xf32>
    %169 = vector.shape_cast %168 : vector<1x16x128xf32> to vector<16x128xf32>
    %170 = arith.addf %167, %169 : vector<16x128xf32>
    %171 = vector.extract_strided_slice %105 {offsets = [5, 0, 0], sizes = [1, 16, 128], strides = [1, 1, 1]} : vector<8x16x128xf32> to vector<1x16x128xf32>
    %172 = vector.shape_cast %171 : vector<1x16x128xf32> to vector<16x128xf32>
    %173 = arith.mulf %172, %170 : vector<16x128xf32>
    %cst_27 = arith.constant dense<0.000000e+00> : vector<128xf32>
    %174 = vector.multi_reduction <add>, %173, %cst_27 [0] : vector<16x128xf32> to vector<128xf32>
    %175 = vector.shape_cast %174 : vector<128xf32> to vector<1x128xf32>
    %176 = vector.extract_strided_slice %87 {offsets = [6, 0, 0], sizes = [1, 16, 128], strides = [1, 1, 1]} : vector<8x16x128xf32> to vector<1x16x128xf32>
    %177 = vector.shape_cast %176 : vector<1x16x128xf32> to vector<16x128xf32>
    %178 = arith.mulf %177, %170 : vector<16x128xf32>
    %179 = vector.extract_strided_slice %108 {offsets = [6, 0, 0], sizes = [1, 16, 128], strides = [1, 1, 1]} : vector<8x16x128xf32> to vector<1x16x128xf32>
    %180 = vector.shape_cast %179 : vector<1x16x128xf32> to vector<16x128xf32>
    %181 = arith.addf %178, %180 : vector<16x128xf32>
    %182 = vector.extract_strided_slice %105 {offsets = [6, 0, 0], sizes = [1, 16, 128], strides = [1, 1, 1]} : vector<8x16x128xf32> to vector<1x16x128xf32>
    %183 = vector.shape_cast %182 : vector<1x16x128xf32> to vector<16x128xf32>
    %184 = arith.mulf %183, %181 : vector<16x128xf32>
    %cst_28 = arith.constant dense<0.000000e+00> : vector<128xf32>
    %185 = vector.multi_reduction <add>, %184, %cst_28 [0] : vector<16x128xf32> to vector<128xf32>
    %186 = vector.shape_cast %185 : vector<128xf32> to vector<1x128xf32>
    %187 = vector.extract_strided_slice %87 {offsets = [7, 0, 0], sizes = [1, 16, 128], strides = [1, 1, 1]} : vector<8x16x128xf32> to vector<1x16x128xf32>
    %188 = vector.shape_cast %187 : vector<1x16x128xf32> to vector<16x128xf32>
    %189 = arith.mulf %188, %181 : vector<16x128xf32>
    %190 = vector.extract_strided_slice %108 {offsets = [7, 0, 0], sizes = [1, 16, 128], strides = [1, 1, 1]} : vector<8x16x128xf32> to vector<1x16x128xf32>
    %191 = vector.shape_cast %190 : vector<1x16x128xf32> to vector<16x128xf32>
    %192 = arith.addf %189, %191 : vector<16x128xf32>
    %193 = vector.extract_strided_slice %105 {offsets = [7, 0, 0], sizes = [1, 16, 128], strides = [1, 1, 1]} : vector<8x16x128xf32> to vector<1x16x128xf32>
    %194 = vector.shape_cast %193 : vector<1x16x128xf32> to vector<16x128xf32>
    %195 = arith.mulf %194, %192 : vector<16x128xf32>
    %cst_29 = arith.constant dense<0.000000e+00> : vector<128xf32>
    %196 = vector.multi_reduction <add>, %195, %cst_29 [0] : vector<16x128xf32> to vector<128xf32>
    %197 = vector.shape_cast %196 : vector<128xf32> to vector<1x128xf32>
    %198 = tpu.concatenate %120, %131, %142, %153, %164, %175, %186, %197 in 0 : vector<1x128xf32>, vector<1x128xf32>, vector<1x128xf32>, vector<1x128xf32>, vector<1x128xf32>, vector<1x128xf32>, vector<1x128xf32>, vector<1x128xf32> -> vector<8x128xf32>
    %199 = vector.extract_strided_slice %198 {offsets = [0, 0], sizes = [8, 64], strides = [1, 1]} : vector<8x128xf32> to vector<8x64xf32>
    %200 = vector.extract_strided_slice %198 {offsets = [0, 64], sizes = [8, 64], strides = [1, 1]} : vector<8x128xf32> to vector<8x64xf32>
    %201 = tpu.concatenate %199, %200 in 0 : vector<8x64xf32>, vector<8x64xf32> -> vector<16x64xf32>
    %202 = vector.broadcast %4 : vector<1x64xf32> to vector<16x64xf32>
    %203 = arith.mulf %202, %58 : vector<16x64xf32>
    %204 = arith.addf %201, %203 : vector<16x64xf32>
    %205 = arith.negf %9 : vector<16x64xf32>
    %206 = math.exp %205 : vector<16x64xf32>
    %cst_30 = arith.constant 1.000000e+00 : f32
    %207 = vector.broadcast %cst_30 : f32 to vector<16x64xf32>
    %208 = arith.addf %207, %206 : vector<16x64xf32>
    %209 = arith.divf %207, %208 : vector<16x64xf32>
    %210 = arith.mulf %9, %209 : vector<16x64xf32>
    %211 = arith.mulf %204, %210 : vector<16x64xf32>
    %c0_31 = arith.constant 0 : index
    %c0_32 = arith.constant 0 : index
    %212 = vector.load %arg5[%c0_31, %c0_32] : memref<64x128xf32, #tpu.memory_space<vmem>>, vector<64x128xf32>
    %cst_33 = arith.constant dense<0.000000e+00> : vector<16x128xf32>
    %213 = tpu.matmul %211, %212, %cst_33 {dimension_numbers = #tpu.dot_dimension_numbers<[1], [0], [0], [1], [0, 0, 1, 1], [], []>} : vector<16x64xf32>, vector<64x128xf32>, vector<16x128xf32> -> vector<16x128xf32>
    %214 = vector.broadcast %5 : vector<1x128xf32> to vector<16x128xf32>
    %215 = arith.addf %10, %214 : vector<16x128xf32>
    %216 = arith.negf %215 : vector<16x128xf32>
    %217 = math.exp %216 : vector<16x128xf32>
    %cst_34 = arith.constant 1.000000e+00 : f32
    %218 = vector.broadcast %cst_34 : f32 to vector<16x128xf32>
    %219 = arith.addf %218, %217 : vector<16x128xf32>
    %220 = arith.divf %218, %219 : vector<16x128xf32>
    %221 = arith.mulf %220, %0 : vector<16x128xf32>
    %cst_35 = arith.constant 1.000000e+00 : f32
    %222 = vector.broadcast %cst_35 : f32 to vector<16x128xf32>
    %223 = arith.subf %222, %220 : vector<16x128xf32>
    %224 = arith.mulf %223, %213 : vector<16x128xf32>
    %225 = arith.addf %221, %224 : vector<16x128xf32>
    %c0_36 = arith.constant 0 : index
    %c0_37 = arith.constant 0 : index
    %226 = vector.load %arg7[%c0_36, %c0_37] : memref<16x128xf32, #tpu.memory_space<vmem>>, vector<16x128xf32>
    tpu.vector_store %arg7[%c0_36, %c0_37], %225 {strides = array<i32>} : memref<16x128xf32, #tpu.memory_space<vmem>>, vector<16x128xf32>,
    return
  }
}

</mosaic_0001>

<llo_original>
// kernel: tpu_custom_call.1
$region0: #{tpu_custom_call.1}
  #allocation0 [shape = 'u32[]', space=smem, size = 0x4, offset = 0x4, fixed_abs, tag = 'smem constant byte address 0x4 - core index']
  #allocation1 [shape = 'u32[144,128]{1,0:T(1,128)}', space=vmem, size = 0x12000, scoped, tag = 'internal scratch']
  %s0 = inlined_call_operand.hbm [shape: f32[16,128], index: 0, kind: input, shape index: {}]
  %s1 = inlined_call_operand.hbm [shape: f32[128,256], index: 1, kind: input, shape index: {}]
  %s2 = inlined_call_operand.hbm [shape: f32[4,64], index: 2, kind: input, shape index: {}]
  %s3 = inlined_call_operand.hbm [shape: f32[64,128], index: 3, kind: input, shape index: {}]
  %s4 = inlined_call_operand.hbm [shape: f32[16,128], index: 4, kind: input, shape index: {}]
  %s5 = inlined_call_operand.hbm [shape: f32[64,128], index: 5, kind: input, shape index: {}]
  %s6 = inlined_call_operand.vmem [shape: f32[4,128], index: 6, kind: input, shape index: {}]
  %s7 = inlined_call_operand.hbm [shape: f32[16,128], index: 7, kind: output, shape index: {}]
  %s8 = sld [smem:[#allocation0]]
  $region62: #{tpu_custom_call.1} parent=0
    _
  %s10 = ssub.s32 1, %s8
  %s11 = scalar_select 0, %s10, %s8
  $region1: #{tpu_custom_call.1} parent=0
    #allocation2 [shape = 'u8[8192]{0}', space=vmem, size = 0x2000, scoped, tag = 'input window, operand 0, single buffered']
    #allocation3 [shape = 's32[1]{0}', space=sflag, size = 0x4, scoped, tag = 'scoped memory for tpu_custom_call.1']
    #allocation4 [shape = 's32[1]{0}', space=sflag, size = 0x4, scoped, tag = 'scoped memory for tpu_custom_call.1']
    #allocation5 [shape = 'u8[131072]{0}', space=vmem, size = 0x20000, scoped, tag = 'input window, operand 1, single buffered']
    #allocation6 [shape = 's32[1]{0}', space=sflag, size = 0x4, scoped, tag = 'scoped memory for tpu_custom_call.1']
    #allocation7 [shape = 'u8[2048]{0}', space=vmem, size = 0x800, scoped, tag = 'input window, operand 2, single buffered']
    #allocation8 [shape = 'u8[32768]{0}', space=vmem, size = 0x8000, scoped, tag = 'input window, operand 3, single buffered']
    #allocation9 [shape = 's32[1]{0}', space=sflag, size = 0x4, scoped, tag = 'scoped memory for tpu_custom_call.1']
    #allocation10 [shape = 'u8[8192]{0}', space=vmem, size = 0x2000, scoped, tag = 'input window, operand 4, single buffered']
    #allocation11 [shape = 'u8[32768]{0}', space=vmem, size = 0x8000, scoped, tag = 'input window, operand 5, single buffered']
    #allocation12 [shape = 's32[1]{0}', space=sflag, size = 0x4, scoped, tag = 'scoped memory for tpu_custom_call.1']
    #allocation13 [shape = 'u8[8192]{0}', space=vmem, size = 0x2000, scoped, tag = 'output window, operand 0, single buffered']
    %12 = vsyncpa [#allocation3], 0
    %13 = vsyncpa [#allocation6], 0
    %14 = vsyncpa [#allocation9], 0
    %15 = vsyncpa [#allocation12], 0
    %16 = vsyncpa [#allocation4], 0
    // Predicated region
    $region2: #{tpu_custom_call.1} parent=1 // pred_check
      _
    $region3: #{tpu_custom_call.1} parent=1 // pred_check_branch
      %18 = sbr.rel (0) target = $region5
    $region4: #{tpu_custom_call.1} parent=1 // pred_region
      %s20 = ssub.s32 256, 256
      %21 = vsyncadd [#allocation3], %s20
      %s22 = sshll.u32 [#allocation2], 4
      %s23 = int_to_ptr.vmem [resolvable:$true] %s22
      %28 = dma.hbm_to_vmem [thread:$0]  %s0, 256, %s23, [#allocation3], 128, 128, 8
    $region5: #{tpu_custom_call.1} parent=1 // pred_fallthru
      _
    // Predicated region
    $region6: #{tpu_custom_call.1} parent=1 // pred_check
      _
    $region7: #{tpu_custom_call.1} parent=1 // pred_check_branch
      %30 = sbr.rel (0) target = $region9
    $region8: #{tpu_custom_call.1} parent=1 // pred_region
      %s32 = ssub.s32 4096, 4096
      %33 = vsyncadd [#allocation6], %s32
      %s34 = sshll.u32 [#allocation5], 4
      %s35 = int_to_ptr.vmem [resolvable:$true] %s34
      %40 = dma.hbm_to_vmem [thread:$0]  %s1, 4096, %s35, [#allocation6], 256, 256, 16
    $region9: #{tpu_custom_call.1} parent=1 // pred_fallthru
      _
    // Predicated region
    $region10: #{tpu_custom_call.1} parent=1 // pred_check
      _
    $region11: #{tpu_custom_call.1} parent=1 // pred_check_branch
      %42 = sbr.rel (0) target = $region13
    $region12: #{tpu_custom_call.1} parent=1 // pred_region
      %s44 = ssub.s32 64, 64
      %45 = vsyncadd [#allocation6], %s44
      %s47 = sshll.u32 [#allocation7], 4
      %s48 = int_to_ptr.vmem [resolvable:$true] %s47
      %50 = dma.hbm_to_vmem [thread:$0]  %s2, 64, %s48, [#allocation6]
    $region13: #{tpu_custom_call.1} parent=1 // pred_fallthru
      _
    // Predicated region
    $region14: #{tpu_custom_call.1} parent=1 // pred_check
      _
    $region15: #{tpu_custom_call.1} parent=1 // pred_check_branch
      %52 = sbr.rel (0) target = $region17
    $region16: #{tpu_custom_call.1} parent=1 // pred_region
      %s54 = ssub.s32 1024, 1024
      %55 = vsyncadd [#allocation9], %s54
      %s56 = sshll.u32 [#allocation8], 4
      %s57 = int_to_ptr.vmem [resolvable:$true] %s56
      %62 = dma.hbm_to_vmem [thread:$0]  %s3, 1024, %s57, [#allocation9], 128, 128, 8
    $region17: #{tpu_custom_call.1} parent=1 // pred_fallthru
      _
    // Predicated region
    $region18: #{tpu_custom_call.1} parent=1 // pred_check
      _
    $region19: #{tpu_custom_call.1} parent=1 // pred_check_branch
      %64 = sbr.rel (0) target = $region21
    $region20: #{tpu_custom_call.1} parent=1 // pred_region
      %s66 = ssub.s32 256, 256
      %67 = vsyncadd [#allocation9], %s66
      %s68 = sshll.u32 [#allocation10], 4
      %s69 = int_to_ptr.vmem [resolvable:$true] %s68
      %74 = dma.hbm_to_vmem [thread:$0]  %s4, 256, %s69, [#allocation9], 128, 128, 8
    $region21: #{tpu_custom_call.1} parent=1 // pred_fallthru
      _
    // Predicated region
    $region22: #{tpu_custom_call.1} parent=1 // pred_check
      _
    $region23: #{tpu_custom_call.1} parent=1 // pred_check_branch
      %76 = sbr.rel (0) target = $region25
    $region24: #{tpu_custom_call.1} parent=1 // pred_region
      %s78 = ssub.s32 1024, 1024
      %79 = vsyncadd [#allocation12], %s78
      %s80 = sshll.u32 [#allocation11], 4
      %s81 = int_to_ptr.vmem [resolvable:$true] %s80
      %86 = dma.hbm_to_vmem [thread:$0]  %s5, 1024, %s81, [#allocation12], 128, 128, 8
    $region25: #{tpu_custom_call.1} parent=1 // pred_fallthru
      _
    // Predicated region
    $region26: #{tpu_custom_call.1} parent=1 // pred_check
      _
    $region27: #{tpu_custom_call.1} parent=1 // pred_check_branch
      %88 = sbr.rel (0) target = $region29
    $region28: #{tpu_custom_call.1} parent=1 // pred_region
      _
    $region29: #{tpu_custom_call.1} parent=1 // pred_fallthru
      _
    // Predicated region
    $region30: #{tpu_custom_call.1} parent=1 // pred_check
      _
    $region31: #{tpu_custom_call.1} parent=1 // pred_check_branch
      %90 = sbr.rel (0) target = $region33
    $region32: #{tpu_custom_call.1} parent=1 // pred_region
      %91 = dma.done [#allocation3], 256
    $region33: #{tpu_custom_call.1} parent=1 // pred_fallthru
      _
    // Predicated region
    $region34: #{tpu_custom_call.1} parent=1 // pred_check
      _
    $region35: #{tpu_custom_call.1} parent=1 // pred_check_branch
      %93 = sbr.rel (0) target = $region37
    $region36: #{tpu_custom_call.1} parent=1 // pred_region
      %94 = dma.done [#allocation6], 4096
    $region37: #{tpu_custom_call.1} parent=1 // pred_fallthru
      _
    // Predicated region
    $region38: #{tpu_custom_call.1} parent=1 // pred_check
      _
    $region39: #{tpu_custom_call.1} parent=1 // pred_check_branch
      %96 = sbr.rel (0) target = $region41
    $region40: #{tpu_custom_call.1} parent=1 // pred_region
      %97 = dma.done [#allocation6], 64
    $region41: #{tpu_custom_call.1} parent=1 // pred_fallthru
      _
    // Predicated region
    $region42: #{tpu_custom_call.1} parent=1 // pred_check
      _
    $region43: #{tpu_custom_call.1} parent=1 // pred_check_branch
      %99 = sbr.rel (0) target = $region45
    $region44: #{tpu_custom_call.1} parent=1 // pred_region
      %100 = dma.done [#allocation9], 1024
    $region45: #{tpu_custom_call.1} parent=1 // pred_fallthru
      _
    // Predicated region
    $region46: #{tpu_custom_call.1} parent=1 // pred_check
      _
    $region47: #{tpu_custom_call.1} parent=1 // pred_check_branch
      %102 = sbr.rel (0) target = $region49
    $region48: #{tpu_custom_call.1} parent=1 // pred_region
      %103 = dma.done [#allocation9], 256
    $region49: #{tpu_custom_call.1} parent=1 // pred_fallthru
      _
    // Predicated region
    $region50: #{tpu_custom_call.1} parent=1 // pred_check
      _
    $region51: #{tpu_custom_call.1} parent=1 // pred_check_branch
      %105 = sbr.rel (0) target = $region53
    $region52: #{tpu_custom_call.1} parent=1 // pred_region
      %106 = dma.done [#allocation12], 1024
    $region53: #{tpu_custom_call.1} parent=1 // pred_fallthru
      _
    %v107 = vld [vmem:[#allocation2] sm:$0xff]
    %v108 = vld [vmem:[#allocation2 + $0x8] sm:$0xff]
    %v109 = vld [vmem:[%s6] sm:$0xf]
    %v110 = vld [vmem:[#allocation5] sm:$0xff]
    %v111 = vld [vmem:[#allocation5 + $0x8] sm:$0xff]
    %v112 = vld [vmem:[#allocation5 + $0x10] sm:$0xff]
    %v113 = vld [vmem:[#allocation5 + $0x18] sm:$0xff]
    %v114 = vld [vmem:[#allocation5 + $0x20] sm:$0xff]
    %v115 = vld [vmem:[#allocation5 + $0x28] sm:$0xff]
    %v116 = vld [vmem:[#allocation5 + $0x30] sm:$0xff]
    %v117 = vld [vmem:[#allocation5 + $0x38] sm:$0xff]
    %v118 = vld [vmem:[#allocation5 + $0x40] sm:$0xff]
    %v119 = vld [vmem:[#allocation5 + $0x48] sm:$0xff]
    %v120 = vld [vmem:[#allocation5 + $0x50] sm:$0xff]
    %v121 = vld [vmem:[#allocation5 + $0x58] sm:$0xff]
    %v122 = vld [vmem:[#allocation5 + $0x60] sm:$0xff]
    %v123 = vld [vmem:[#allocation5 + $0x68] sm:$0xff]
    %v124 = vld [vmem:[#allocation5 + $0x70] sm:$0xff]
    %v125 = vld [vmem:[#allocation5 + $0x78] sm:$0xff]
    %v126 = vld [vmem:[#allocation5 + $0x80] sm:$0xff]
    %v127 = vld [vmem:[#allocation5 + $0x88] sm:$0xff]
    %v128 = vld [vmem:[#allocation5 + $0x90] sm:$0xff]
    %v129 = vld [vmem:[#allocation5 + $0x98] sm:$0xff]
    %v130 = vld [vmem:[#allocation5 + $0xa0] sm:$0xff]
    %v131 = vld [vmem:[#allocation5 + $0xa8] sm:$0xff]
    %v132 = vld [vmem:[#allocation5 + $0xb0] sm:$0xff]
    %v133 = vld [vmem:[#allocation5 + $0xb8] sm:$0xff]
    %v134 = vld [vmem:[#allocation5 + $0xc0] sm:$0xff]
    %v135 = vld [vmem:[#allocation5 + $0xc8] sm:$0xff]
    %v136 = vld [vmem:[#allocation5 + $0xd0] sm:$0xff]
    %v137 = vld [vmem:[#allocation5 + $0xd8] sm:$0xff]
    %v138 = vld [vmem:[#allocation5 + $0xe0] sm:$0xff]
    %v139 = vld [vmem:[#allocation5 + $0xe8] sm:$0xff]
    %v140 = vld [vmem:[#allocation5 + $0xf0] sm:$0xff]
    %v141 = vld [vmem:[#allocation5 + $0xf8] sm:$0xff]
    %142 = vmatprep.subr.mxu0 %v141
    %143 = vmatpush1.msra.mxu0 %v140
    %144 = vmatprep.subr.mxu0 %v139
    %145 = vmatpush1.msra.mxu0 %v138
    %146 = vmatprep.subr.mxu0 %v137
    %147 = vmatpush1.msra.mxu0 %v136
    %148 = vmatprep.subr.mxu0 %v135
    %149 = vmatpush1.msra.mxu0 %v134
    %150 = vmatprep.subr.mxu0 %v133
    %151 = vmatpush1.msra.mxu0 %v132
    %152 = vmatprep.subr.mxu0 %v131
    %153 = vmatpush1.msra.mxu0 %v130
    %154 = vmatprep.subr.mxu0 %v129
    %155 = vmatpush1.msra.mxu0 %v128
    %156 = vmatprep.subr.mxu0 %v127
    %157 = vmatpush1.msra.mxu0 %v126
    %158 = vmatprep.subr.mxu0 %v125
    %159 = vmatpush1.msra.mxu0 %v124
    %160 = vmatprep.subr.mxu0 %v123
    %161 = vmatpush1.msra.mxu0 %v122
    %162 = vmatprep.subr.mxu0 %v121
    %163 = vmatpush1.msra.mxu0 %v120
    %164 = vmatprep.subr.mxu0 %v119
    %165 = vmatpush1.msra.mxu0 %v118
    %166 = vmatprep.subr.mxu0 %v117
    %167 = vmatpush1.msra.mxu0 %v116
    %168 = vmatprep.subr.mxu0 %v115
    %169 = vmatpush1.msra.mxu0 %v114
    %170 = vmatprep.subr.mxu0 %v113
    %171 = vmatpush1.msra.mxu0 %v112
    %172 = vmatprep.subr.mxu0 %v111
    %173 = vmatpush1.msra.mxu0 %v110
    %174 = vmatprep.subr.mxu0 0.0
    %175 = vmatpush2.msra.mxu0 0.0
    %176 = vmatprep.subr.mxu0 0.0
    %177 = vmatpush2.msra.mxu0 0.0
    %178 = vmatprep.subr.mxu0 0.0
    %179 = vmatpush2.msra.mxu0 0.0
    %180 = vmatprep.subr.mxu0 0.0
    %181 = vmatpush2.msra.mxu0 0.0
    %182 = vmatprep.subr.mxu0 0.0
    %183 = vmatpush2.msra.mxu0 0.0
    %184 = vmatprep.subr.mxu0 0.0
    %185 = vmatpush2.msra.mxu0 0.0
    %186 = vmatprep.subr.mxu0 0.0
    %187 = vmatpush2.msra.mxu0 0.0
    %188 = vmatprep.subr.mxu0 0.0
    %189 = vmatpush2.msra.mxu0 0.0
    %190 = vmatprep.subr.mxu0 0.0
    %191 = vmatpush2.msra.mxu0 0.0
    %192 = vmatprep.subr.mxu0 0.0
    %193 = vmatpush2.msra.mxu0 0.0
    %194 = vmatprep.subr.mxu0 0.0
    %195 = vmatpush2.msra.mxu0 0.0
    %196 = vmatprep.subr.mxu0 0.0
    %197 = vmatpush2.msra.mxu0 0.0
    %198 = vmatprep.subr.mxu0 0.0
    %199 = vmatpush2.msra.mxu0 0.0
    %200 = vmatprep.subr.mxu0 0.0
    %201 = vmatpush2.msra.mxu0 0.0
    %202 = vmatprep.subr.mxu0 0.0
    %203 = vmatpush2.msra.mxu0 0.0
    %204 = vmatprep.subr.mxu0 0.0
    %205 = vmatpush2.msra.mxu0 0.0
    %206 = vmatprep.mubr.f32.mxu0 0.0
    %207 = vmatmul.mubr.f32.gmra.mxu0 %v107
    %v208 = vpop.f32.mrf.mxu0
    %v209 = vadd.f32 0.0, %v208
    %v210 = vpop.f32.mrf.mxu0
    %v211 = vadd.f32 0.0, %v210
    %212 = vmatprep.mubr.f32.mxu0 0.0
    %213 = vmatmul.mubr.f32.gmra.mxu0 %v108
    %v214 = vpop.f32.mrf.mxu0
    %v215 = vadd.f32 0.0, %v214
    %v216 = vpop.f32.mrf.mxu0
    %v217 = vadd.f32 0.0, %v216
    %218 = vdwg.mxu0
    %v219 = vld [vmem:[#allocation7] sm:$0xf]
    %v220 = vlaneseq
    %v221 = vshrl.u32 %v220, 7
    %v222 = vadd.s32 %v221, 8
    %v223 = vand.u32 %v221, 7
    %v224 = vand.u32 %v222, 7
    %v225 = vlaneseq
    %v226 = vshrl.u32 %v225, 7
    %v227 = vsub.s32 3, %v226
    %v228 = vrot.slane %v219, %v227
    %v229 = vmul.f32 %v209, %v228
    %v230 = vmul.f32 %v215, %v228
    %v231 = vlaneseq
    %v232 = vshrl.u32 %v231, 7
    %v233 = vsub.s32 0, %v232
    %v234 = vrot.slane %v109, %v233
    %v235 = vadd.f32 %v234, %v229
    %v236 = vadd.f32 %v234, %v230
    %vm239 = vcmask 1040384
    %v240 = vrot.slane %v209, 7
    %v241 = vrot.slane %v215, 7
    %v242 = vsel %vm239, %v240, %v241
    %v245 = vsel %vm239, 0.0, %v240
    %vm246 = vcmp.ge.s32.totalorder %v223, 1
    %vm247 = vcmp.ge.s32.totalorder %v224, 1
    %v248 = vsel %vm246, %v245, 0.0
    %v249 = vsel %vm247, %v242, 0.0
    %v250 = vlaneseq
    %v251 = vshrl.u32 %v250, 7
    %v252 = vsub.s32 2, %v251
    %v253 = vrot.slane %v219, %v252
    %v254 = vmul.f32 %v248, %v253
    %v255 = vmul.f32 %v249, %v253
    %v256 = vadd.f32 %v235, %v254
    %v257 = vadd.f32 %v236, %v255
    %vm258 = vcmask 1041408
    %v259 = vrot.slane %v209, 6
    %v260 = vrot.slane %v215, 6
    %v261 = vsel %vm258, %v259, %v260
    %v264 = vsel %vm258, 0.0, %v259
    %vm265 = vcmp.ge.s32.totalorder %v223, 2
    %vm266 = vcmp.ge.s32.totalorder %v224, 2
    %v267 = vsel %vm265, %v264, 0.0
    %v268 = vsel %vm266, %v261, 0.0
    %v269 = vlaneseq
    %v270 = vshrl.u32 %v269, 7
    %v271 = vsub.s32 1, %v270
    %v272 = vrot.slane %v219, %v271
    %v273 = vmul.f32 %v267, %v272
    %v274 = vmul.f32 %v268, %v272
    %v275 = vadd.f32 %v256, %v273
    %v276 = vadd.f32 %v257, %v274
    %vm277 = vcmask 1042432
    %v278 = vrot.slane %v209, 5
    %v279 = vrot.slane %v215, 5
    %v280 = vsel %vm277, %v278, %v279
    %v283 = vsel %vm277, 0.0, %v278
    %vm284 = vcmp.ge.s32.totalorder %v223, 3
    %vm285 = vcmp.ge.s32.totalorder %v224, 3
    %v286 = vsel %vm284, %v283, 0.0
    %v287 = vsel %vm285, %v280, 0.0
    %v288 = vlaneseq
    %v289 = vshrl.u32 %v288, 7
    %v290 = vsub.s32 0, %v289
    %v291 = vrot.slane %v219, %v290
    %v292 = vmul.f32 %v286, %v291
    %v293 = vmul.f32 %v287, %v291
    %v294 = vadd.f32 %v275, %v292
    %v295 = vadd.f32 %v276, %v293
    %v296 = vxor.u32 %v294, 2147483648
    %v297 = vxor.u32 %v295, 2147483648
    %v298 = vmul.f32 %v296, 1.442695
    %v299 = vpow.pop %v298
    %v300 = vmul.f32 %v297, 1.442695
    %v301 = vpow.pop %v300
    %v302 = vadd.f32 %v299, 1.0
    %v303 = vadd.f32 %v301, 1.0
    %v304 = vrcp.pop %v302
    %v305 = vmul.f32 1.0, %v304
    %v306 = vrcp.pop %v303
    %v307 = vmul.f32 1.0, %v306
    %v308 = vmul.f32 %v294, %v305
    %v309 = vmul.f32 %v295, %v307
    %v310 = vld [vmem:[#allocation8] sm:$0xff]
    %v311 = vld [vmem:[#allocation8 + $0x8] sm:$0xff]
    %v312 = vld [vmem:[#allocation8 + $0x10] sm:$0xff]
    %v313 = vld [vmem:[#allocation8 + $0x18] sm:$0xff]
    %v314 = vld [vmem:[#allocation8 + $0x20] sm:$0xff]
    %v315 = vld [vmem:[#allocation8 + $0x28] sm:$0xff]
    %v316 = vld [vmem:[#allocation8 + $0x30] sm:$0xff]
    %v317 = vld [vmem:[#allocation8 + $0x38] sm:$0xff]
    %vm318 = vcmask 523264
    %v320 = vsel %vm318, %v308, 0
    %v323 = vsel %vm318, %v309, 0
    %325 = vmatprep.subr.mxu0 0.0
    %326 = vmatpush1.msra.mxu0 0.0
    %327 = vmatprep.subr.mxu0 0.0
    %328 = vmatpush1.msra.mxu0 0.0
    %329 = vmatprep.subr.mxu0 0.0
    %330 = vmatpush1.msra.mxu0 0.0
    %331 = vmatprep.subr.mxu0 0.0
    %332 = vmatpush1.msra.mxu0 0.0
    %333 = vmatprep.subr.mxu0 0.0
    %334 = vmatpush1.msra.mxu0 0.0
    %335 = vmatprep.subr.mxu0 0.0
    %336 = vmatpush1.msra.mxu0 0.0
    %337 = vmatprep.subr.mxu0 0.0
    %338 = vmatpush1.msra.mxu0 0.0
    %339 = vmatprep.subr.mxu0 0.0
    %340 = vmatpush1.msra.mxu0 0.0
    %341 = vmatprep.subr.mxu0 0.0
    %342 = vmatpush1.msra.mxu0 %v317
    %343 = vmatprep.subr.mxu0 0.0
    %344 = vmatpush1.msra.mxu0 %v316
    %345 = vmatprep.subr.mxu0 0.0
    %346 = vmatpush1.msra.mxu0 %v315
    %347 = vmatprep.subr.mxu0 0.0
    %348 = vmatpush1.msra.mxu0 %v314
    %349 = vmatprep.subr.mxu0 0.0
    %350 = vmatpush1.msra.mxu0 %v313
    %351 = vmatprep.subr.mxu0 0.0
    %352 = vmatpush1.msra.mxu0 %v312
    %353 = vmatprep.subr.mxu0 0.0
    %354 = vmatpush1.msra.mxu0 %v311
    %355 = vmatprep.subr.mxu0 0.0
    %356 = vmatpush1.msra.mxu0 %v310
    %357 = vmatprep.subr.mxu0 0.0
    %358 = vmatpush2.msra.mxu0 0.0
    %359 = vmatprep.subr.mxu0 0.0
    %360 = vmatpush2.msra.mxu0 0.0
    %361 = vmatprep.subr.mxu0 0.0
    %362 = vmatpush2.msra.mxu0 0.0
    %363 = vmatprep.subr.mxu0 0.0
    %364 = vmatpush2.msra.mxu0 0.0
    %365 = vmatprep.subr.mxu0 0.0
    %366 = vmatpush2.msra.mxu0 0.0
    %367 = vmatprep.subr.mxu0 0.0
    %368 = vmatpush2.msra.mxu0 0.0
    %369 = vmatprep.subr.mxu0 0.0
    %370 = vmatpush2.msra.mxu0 0.0
    %371 = vmatprep.subr.mxu0 0.0
    %372 = vmatpush2.msra.mxu0 0.0
    %373 = vmatprep.subr.mxu0 0.0
    %374 = vmatpush2.msra.mxu0 0.0
    %375 = vmatprep.subr.mxu0 0.0
    %376 = vmatpush2.msra.mxu0 0.0
    %377 = vmatprep.subr.mxu0 0.0
    %378 = vmatpush2.msra.mxu0 0.0
    %379 = vmatprep.subr.mxu0 0.0
    %380 = vmatpush2.msra.mxu0 0.0
    %381 = vmatprep.subr.mxu0 0.0
    %382 = vmatpush2.msra.mxu0 0.0
    %383 = vmatprep.subr.mxu0 0.0
    %384 = vmatpush2.msra.mxu0 0.0
    %385 = vmatprep.subr.mxu0 0.0
    %386 = vmatpush2.msra.mxu0 0.0
    %387 = vmatprep.subr.mxu0 0.0
    %388 = vmatpush2.msra.mxu0 0.0
    %389 = vmatprep.mubr.f32.mxu0 0.0
    %390 = vmatmul.mubr.f32.gmra.mxu0 %v320
    %v391 = vpop.f32.mrf.mxu0
    %v392 = vadd.f32 0.0, %v391
    %v393 = vpop.f32.mrf.mxu0
    %394 = vmatprep.mubr.f32.mxu0 0.0
    %395 = vmatmul.mubr.f32.gmra.mxu0 %v323
    %v396 = vpop.f32.mrf.mxu0
    %v397 = vadd.f32 0.0, %v396
    %v398 = vpop.f32.mrf.mxu0
    %399 = vdwg.mxu0
    %v400 = vlaneseq
    %v401 = vshrl.u32 %v400, 7
    %v402 = vsub.s32 1, %v401
    %v403 = vrot.slane %v109, %v402
    %v404 = vadd.f32 %v392, %v403
    %v405 = vadd.f32 %v397, %v403
    %v406 = vmax.f32 %v404, 0.0
    %v407 = vmax.f32 %v405, 0.0
    %v408 = vand.u32 2147483647, %v404
    %v409 = vand.u32 2147483647, %v405
    %v410 = vsub.f32 0.0, %v408
    %v411 = vsub.f32 0.0, %v409
    %v412 = vmul.f32 %v410, 1.442695
    %v413 = vpow.pop %v412
    %v414 = vmul.f32 %v411, 1.442695
    %v415 = vpow.pop %v414
    %v416 = vadd.f32 %v413, 1.0
    %v417 = vlog2.pop %v416
    %v418 = vmul.f32 %v417, 0.6931472
    %v419 = vmul.f32 -0.5, %v413
    %v420 = vadd.f32 %v419, 1.0
    %v421 = vmul.f32 %v420, %v413
    %v422 = vand.u32 2147483647, %v413
    %vm423 = vcmp.lt.f32.partialorder %v422, 0.0004427343
    %v424 = vsel %vm423, %v421, %v418
    %v425 = vadd.f32 %v415, 1.0
    %v426 = vlog2.pop %v425
    %v427 = vmul.f32 %v426, 0.6931472
    %v428 = vmul.f32 -0.5, %v415
    %v429 = vadd.f32 %v428, 1.0
    %v430 = vmul.f32 %v429, %v415
    %v431 = vand.u32 2147483647, %v415
    %vm432 = vcmp.lt.f32.partialorder %v431, 0.0004427343
    %v433 = vsel %vm432, %v430, %v427
    %v434 = vadd.f32 %v406, %v424
    %v435 = vadd.f32 %v407, %v433
    %v436 = vmul.f32 %v434, %v308
    %v437 = vmul.f32 %v435, %v309
    %439 = vrot.lane.b32.xlu0 %v435, 64
    %v440 = vpop.permute.xlu0 %439
    %v442 = vsel %vm318, %v434, %v440
    %444 = vrot.lane.b32.xlu0 %v437, 64
    %v445 = vpop.permute.xlu0 %444
    %v447 = vsel %vm318, %v436, %v445
    %v449 = vcombine.high %v442, %v442
    %v451 = vunpack.c.l.s4 1966171168
    %v452 = vunpack.c.0.s8 %v451
    %v453 = vlaneseq
    %v454 = vshrl.u32 %v453, 7
    %v455 = vsub.s32 %v452, %v454
    %v456 = vrot.slane %v442, %v455
    %v458 = vunpack.c.l.s4 1966171168
    %v459 = vunpack.c.0.s8 %v458
    %v460 = vlaneseq
    %v461 = vshrl.u32 %v460, 7
    %v462 = vsub.s32 %v459, %v461
    %v463 = vrot.slane %v449, %v462
    %v464 = vcombine.high %v456, %v456
    %v465 = vcombine.high %v463, %v463
    %v467 = vunpack.c.l.s4 1966171168
    %v468 = vunpack.c.0.s8 %v467
    %v469 = vlaneseq
    %v470 = vshrl.u32 %v469, 7
    %v471 = vsub.s32 %v468, %v470
    %v472 = vrot.slane %v456, %v471
    %v474 = vunpack.c.l.s4 1966171168
    %v475 = vunpack.c.0.s8 %v474
    %v476 = vlaneseq
    %v477 = vshrl.u32 %v476, 7
    %v478 = vsub.s32 %v475, %v477
    %v479 = vrot.slane %v463, %v478
    %v481 = vunpack.c.l.s4 1966171168
    %v482 = vunpack.c.0.s8 %v481
    %v483 = vlaneseq
    %v484 = vshrl.u32 %v483, 7
    %v485 = vsub.s32 %v482, %v484
    %v486 = vrot.slane %v464, %v485
    %v488 = vunpack.c.l.s4 1966171168
    %v489 = vunpack.c.0.s8 %v488
    %v490 = vlaneseq
    %v491 = vshrl.u32 %v490, 7
    %v492 = vsub.s32 %v489, %v491
    %v493 = vrot.slane %v465, %v492
    %v494 = vcombine.high %v472, %v472
    %v495 = vcombine.high %v479, %v479
    %v496 = vcombine.high %v486, %v486
    %v497 = vcombine.high %v493, %v493
    %v498 = vld [vmem:[#allocation10] sm:$0xff]
    %v499 = vld [vmem:[#allocation10 + $0x8] sm:$0xff]
    %v500 = vlaneseq
    %v501 = vshrl.u32 %v500, 7
    %v502 = vsub.s32 0, %v501
    %v503 = vrot.slane %v472, %v502
    %v504 = vlaneseq
    %v505 = vshrl.u32 %v504, 7
    %v506 = vsub.s32 0, %v505
    %v507 = vrot.slane %v486, %v506
    %v508 = vlaneseq
    %v509 = vshrl.u32 %v508, 7
    %v510 = vsub.s32 0, %v509
    %v511 = vrot.slane %v494, %v510
    %v512 = vlaneseq
    %v513 = vshrl.u32 %v512, 7
    %v514 = vsub.s32 0, %v513
    %v515 = vrot.slane %v496, %v514
    %v516 = vlaneseq
    %v517 = vshrl.u32 %v516, 7
    %v518 = vsub.s32 0, %v517
    %v519 = vrot.slane %v479, %v518
    %v520 = vlaneseq
    %v521 = vshrl.u32 %v520, 7
    %v522 = vsub.s32 0, %v521
    %v523 = vrot.slane %v493, %v522
    %v524 = vlaneseq
    %v525 = vshrl.u32 %v524, 7
    %v526 = vsub.s32 0, %v525
    %v527 = vrot.slane %v495, %v526
    %v528 = vlaneseq
    %v529 = vshrl.u32 %v528, 7
    %v530 = vsub.s32 0, %v529
    %v531 = vrot.slane %v497, %v530
    %v540 = vmul.f32 %v503, %v498
    %v541 = vmul.f32 %v503, %v499
    %v542 = vmul.f32 %v507, %v498
    %v543 = vmul.f32 %v507, %v499
    %v544 = vmul.f32 %v511, %v498
    %v545 = vmul.f32 %v511, %v499
    %v546 = vmul.f32 %v515, %v498
    %v547 = vmul.f32 %v515, %v499
    %v548 = vmul.f32 %v519, %v498
    %v549 = vmul.f32 %v519, %v499
    %v550 = vmul.f32 %v523, %v498
    %v551 = vmul.f32 %v523, %v499
    %v552 = vmul.f32 %v527, %v498
    %v553 = vmul.f32 %v527, %v499
    %v554 = vmul.f32 %v531, %v498
    %v555 = vmul.f32 %v531, %v499
    %v556 = vmul.f32 %v540, 1.442695
    %v557 = vpow.pop %v556
    %v558 = vmul.f32 %v541, 1.442695
    %v559 = vpow.pop %v558
    %v560 = vmul.f32 %v542, 1.442695
    %v561 = vpow.pop %v560
    %v562 = vmul.f32 %v543, 1.442695
    %v563 = vpow.pop %v562
    %v564 = vmul.f32 %v544, 1.442695
    %v565 = vpow.pop %v564
    %v566 = vmul.f32 %v545, 1.442695
    %v567 = vpow.pop %v566
    %v568 = vmul.f32 %v546, 1.442695
    %v569 = vpow.pop %v568
    %v570 = vmul.f32 %v547, 1.442695
    %v571 = vpow.pop %v570
    %v572 = vmul.f32 %v548, 1.442695
    %v573 = vpow.pop %v572
    %v574 = vmul.f32 %v549, 1.442695
    %v575 = vpow.pop %v574
    %v576 = vmul.f32 %v550, 1.442695
    %v577 = vpow.pop %v576
    %v578 = vmul.f32 %v551, 1.442695
    %v579 = vpow.pop %v578
    %v580 = vmul.f32 %v552, 1.442695
    %v581 = vpow.pop %v580
    %v582 = vmul.f32 %v553, 1.442695
    %v583 = vpow.pop %v582
    %v584 = vmul.f32 %v554, 1.442695
    %v585 = vpow.pop %v584
    %v586 = vmul.f32 %v555, 1.442695
    %v587 = vpow.pop %v586
    %v588 = vlaneseq
    %v589 = vshrl.u32 %v588, 7
    %v590 = vsub.s32 0, %v589
    %v591 = vrot.slane %v392, %v590
    %s593 = sor.u32 256, 64
    %594 = vbcast.lane.b32.xlu0 %v591, %s593
    %v595 = vpop.permute.xlu0 %594
    %s597 = sor.u32 256, 72
    %598 = vbcast.lane.b32.xlu0 %v591, %s597
    %v599 = vpop.permute.xlu0 %598
    %v600 = vlaneseq
    %v601 = vshrl.u32 %v600, 7
    %v602 = vsub.s32 1, %v601
    %v603 = vrot.slane %v392, %v602
    %s605 = sor.u32 256, 64
    %606 = vbcast.lane.b32.xlu0 %v603, %s605
    %v607 = vpop.permute.xlu0 %606
    %s609 = sor.u32 256, 72
    %610 = vbcast.lane.b32.xlu0 %v603, %s609
    %v611 = vpop.permute.xlu0 %610
    %v612 = vlaneseq
    %v613 = vshrl.u32 %v612, 7
    %v614 = vsub.s32 2, %v613
    %v615 = vrot.slane %v392, %v614
    %s617 = sor.u32 256, 64
    %618 = vbcast.lane.b32.xlu0 %v615, %s617
    %v619 = vpop.permute.xlu0 %618
    %s621 = sor.u32 256, 72
    %622 = vbcast.lane.b32.xlu0 %v615, %s621
    %v623 = vpop.permute.xlu0 %622
    %v624 = vlaneseq
    %v625 = vshrl.u32 %v624, 7
    %v626 = vsub.s32 3, %v625
    %v627 = vrot.slane %v392, %v626
    %s629 = sor.u32 256, 64
    %630 = vbcast.lane.b32.xlu0 %v627, %s629
    %v631 = vpop.permute.xlu0 %630
    %s633 = sor.u32 256, 72
    %634 = vbcast.lane.b32.xlu0 %v627, %s633
    %v635 = vpop.permute.xlu0 %634
    %v636 = vlaneseq
    %v637 = vshrl.u32 %v636, 7
    %v638 = vsub.s32 4, %v637
    %v639 = vrot.slane %v392, %v638
    %s641 = sor.u32 256, 64
    %642 = vbcast.lane.b32.xlu0 %v639, %s641
    %v643 = vpop.permute.xlu0 %642
    %s645 = sor.u32 256, 72
    %646 = vbcast.lane.b32.xlu0 %v639, %s645
    %v647 = vpop.permute.xlu0 %646
    %v648 = vlaneseq
    %v649 = vshrl.u32 %v648, 7
    %v650 = vsub.s32 5, %v649
    %v651 = vrot.slane %v392, %v650
    %s653 = sor.u32 256, 64
    %654 = vbcast.lane.b32.xlu0 %v651, %s653
    %v655 = vpop.permute.xlu0 %654
    %s657 = sor.u32 256, 72
    %658 = vbcast.lane.b32.xlu0 %v651, %s657
    %v659 = vpop.permute.xlu0 %658
    %v660 = vlaneseq
    %v661 = vshrl.u32 %v660, 7
    %v662 = vsub.s32 6, %v661
    %v663 = vrot.slane %v392, %v662
    %s665 = sor.u32 256, 64
    %666 = vbcast.lane.b32.xlu0 %v663, %s665
    %v667 = vpop.permute.xlu0 %666
    %s669 = sor.u32 256, 72
    %670 = vbcast.lane.b32.xlu0 %v663, %s669
    %v671 = vpop.permute.xlu0 %670
    %v672 = vlaneseq
    %v673 = vshrl.u32 %v672, 7
    %v674 = vsub.s32 7, %v673
    %v675 = vrot.slane %v392, %v674
    %s677 = sor.u32 256, 64
    %678 = vbcast.lane.b32.xlu0 %v675, %s677
    %v679 = vpop.permute.xlu0 %678
    %s681 = sor.u32 256, 72
    %682 = vbcast.lane.b32.xlu0 %v675, %s681
    %v683 = vpop.permute.xlu0 %682
    %v684 = vlaneseq
    %v685 = vshrl.u32 %v684, 7
    %v686 = vsub.s32 0, %v685
    %v687 = vrot.slane %v397, %v686
    %s689 = sor.u32 256, 64
    %690 = vbcast.lane.b32.xlu0 %v687, %s689
    %v691 = vpop.permute.xlu0 %690
    %s693 = sor.u32 256, 72
    %694 = vbcast.lane.b32.xlu0 %v687, %s693
    %v695 = vpop.permute.xlu0 %694
    %v696 = vlaneseq
    %v697 = vshrl.u32 %v696, 7
    %v698 = vsub.s32 1, %v697
    %v699 = vrot.slane %v397, %v698
    %s701 = sor.u32 256, 64
    %702 = vbcast.lane.b32.xlu0 %v699, %s701
    %v703 = vpop.permute.xlu0 %702
    %s705 = sor.u32 256, 72
    %706 = vbcast.lane.b32.xlu0 %v699, %s705
    %v707 = vpop.permute.xlu0 %706
    %v708 = vlaneseq
    %v709 = vshrl.u32 %v708, 7
    %v710 = vsub.s32 2, %v709
    %v711 = vrot.slane %v397, %v710
    %s713 = sor.u32 256, 64
    %714 = vbcast.lane.b32.xlu0 %v711, %s713
    %v715 = vpop.permute.xlu0 %714
    %s717 = sor.u32 256, 72
    %718 = vbcast.lane.b32.xlu0 %v711, %s717
    %v719 = vpop.permute.xlu0 %718
    %v720 = vlaneseq
    %v721 = vshrl.u32 %v720, 7
    %v722 = vsub.s32 3, %v721
    %v723 = vrot.slane %v397, %v722
    %s725 = sor.u32 256, 64
    %726 = vbcast.lane.b32.xlu0 %v723, %s725
    %v727 = vpop.permute.xlu0 %726
    %s729 = sor.u32 256, 72
    %730 = vbcast.lane.b32.xlu0 %v723, %s729
    %v731 = vpop.permute.xlu0 %730
    %v732 = vlaneseq
    %v733 = vshrl.u32 %v732, 7
    %v734 = vsub.s32 4, %v733
    %v735 = vrot.slane %v397, %v734
    %s737 = sor.u32 256, 64
    %738 = vbcast.lane.b32.xlu0 %v735, %s737
    %v739 = vpop.permute.xlu0 %738
    %s741 = sor.u32 256, 72
    %742 = vbcast.lane.b32.xlu0 %v735, %s741
    %v743 = vpop.permute.xlu0 %742
    %v744 = vlaneseq
    %v745 = vshrl.u32 %v744, 7
    %v746 = vsub.s32 5, %v745
    %v747 = vrot.slane %v397, %v746
    %s749 = sor.u32 256, 64
    %750 = vbcast.lane.b32.xlu0 %v747, %s749
    %v751 = vpop.permute.xlu0 %750
    %s753 = sor.u32 256, 72
    %754 = vbcast.lane.b32.xlu0 %v747, %s753
    %v755 = vpop.permute.xlu0 %754
    %v756 = vlaneseq
    %v757 = vshrl.u32 %v756, 7
    %v758 = vsub.s32 6, %v757
    %v759 = vrot.slane %v397, %v758
    %s761 = sor.u32 256, 64
    %762 = vbcast.lane.b32.xlu0 %v759, %s761
    %v763 = vpop.permute.xlu0 %762
    %s765 = sor.u32 256, 72
    %766 = vbcast.lane.b32.xlu0 %v759, %s765
    %v767 = vpop.permute.xlu0 %766
    %v768 = vlaneseq
    %v769 = vshrl.u32 %v768, 7
    %v770 = vsub.s32 7, %v769
    %v771 = vrot.slane %v397, %v770
    %s773 = sor.u32 256, 64
    %774 = vbcast.lane.b32.xlu0 %v771, %s773
    %v775 = vpop.permute.xlu0 %774
    %s777 = sor.u32 256, 72
    %778 = vbcast.lane.b32.xlu0 %v771, %s777
    %v779 = vpop.permute.xlu0 %778
    %v780 = vsel %vm318, %v595, %v691
    %v781 = vsel %vm318, %v599, %v695
    %v782 = vsel %vm318, %v607, %v703
    %v783 = vsel %vm318, %v611, %v707
    %v784 = vsel %vm318, %v619, %v715
    %v785 = vsel %vm318, %v623, %v719
    %v786 = vsel %vm318, %v631, %v727
    %v787 = vsel %vm318, %v635, %v731
    %v788 = vsel %vm318, %v643, %v739
    %v789 = vsel %vm318, %v647, %v743
    %v790 = vsel %vm318, %v655, %v751
    %v791 = vsel %vm318, %v659, %v755
    %v792 = vsel %vm318, %v667, %v763
    %v793 = vsel %vm318, %v671, %v767
    %v794 = vsel %vm318, %v679, %v775
    %v795 = vsel %vm318, %v683, %v779
    %s797 = sor.u32 256, 80
    %798 = vbcast.lane.b32.xlu0 %v591, %s797
    %v799 = vpop.permute.xlu0 %798
    %s801 = sor.u32 256, 88
    %802 = vbcast.lane.b32.xlu0 %v591, %s801
    %v803 = vpop.permute.xlu0 %802
    %s805 = sor.u32 256, 80
    %806 = vbcast.lane.b32.xlu0 %v603, %s805
    %v807 = vpop.permute.xlu0 %806
    %s809 = sor.u32 256, 88
    %810 = vbcast.lane.b32.xlu0 %v603, %s809
    %v811 = vpop.permute.xlu0 %810
    %s813 = sor.u32 256, 80
    %814 = vbcast.lane.b32.xlu0 %v615, %s813
    %v815 = vpop.permute.xlu0 %814
    %s817 = sor.u32 256, 88
    %818 = vbcast.lane.b32.xlu0 %v615, %s817
    %v819 = vpop.permute.xlu0 %818
    %s821 = sor.u32 256, 80
    %822 = vbcast.lane.b32.xlu0 %v627, %s821
    %v823 = vpop.permute.xlu0 %822
    %s825 = sor.u32 256, 88
    %826 = vbcast.lane.b32.xlu0 %v627, %s825
    %v827 = vpop.permute.xlu0 %826
    %s829 = sor.u32 256, 80
    %830 = vbcast.lane.b32.xlu0 %v639, %s829
    %v831 = vpop.permute.xlu0 %830
    %s833 = sor.u32 256, 88
    %834 = vbcast.lane.b32.xlu0 %v639, %s833
    %v835 = vpop.permute.xlu0 %834
    %s837 = sor.u32 256, 80
    %838 = vbcast.lane.b32.xlu0 %v651, %s837
    %v839 = vpop.permute.xlu0 %838
    %s841 = sor.u32 256, 88
    %842 = vbcast.lane.b32.xlu0 %v651, %s841
    %v843 = vpop.permute.xlu0 %842
    %s845 = sor.u32 256, 80
    %846 = vbcast.lane.b32.xlu0 %v663, %s845
    %v847 = vpop.permute.xlu0 %846
    %s849 = sor.u32 256, 88
    %850 = vbcast.lane.b32.xlu0 %v663, %s849
    %v851 = vpop.permute.xlu0 %850
    %s853 = sor.u32 256, 80
    %854 = vbcast.lane.b32.xlu0 %v675, %s853
    %v855 = vpop.permute.xlu0 %854
    %s857 = sor.u32 256, 88
    %858 = vbcast.lane.b32.xlu0 %v675, %s857
    %v859 = vpop.permute.xlu0 %858
    %s861 = sor.u32 256, 80
    %862 = vbcast.lane.b32.xlu0 %v687, %s861
    %v863 = vpop.permute.xlu0 %862
    %s865 = sor.u32 256, 88
    %866 = vbcast.lane.b32.xlu0 %v687, %s865
    %v867 = vpop.permute.xlu0 %866
    %s869 = sor.u32 256, 80
    %870 = vbcast.lane.b32.xlu0 %v699, %s869
    %v871 = vpop.permute.xlu0 %870
    %s873 = sor.u32 256, 88
    %874 = vbcast.lane.b32.xlu0 %v699, %s873
    %v875 = vpop.permute.xlu0 %874
    %s877 = sor.u32 256, 80
    %878 = vbcast.lane.b32.xlu0 %v711, %s877
    %v879 = vpop.permute.xlu0 %878
    %s881 = sor.u32 256, 88
    %882 = vbcast.lane.b32.xlu0 %v711, %s881
    %v883 = vpop.permute.xlu0 %882
    %s885 = sor.u32 256, 80
    %886 = vbcast.lane.b32.xlu0 %v723, %s885
    %v887 = vpop.permute.xlu0 %886
    %s889 = sor.u32 256, 88
    %890 = vbcast.lane.b32.xlu0 %v723, %s889
    %v891 = vpop.permute.xlu0 %890
    %s893 = sor.u32 256, 80
    %894 = vbcast.lane.b32.xlu0 %v735, %s893
    %v895 = vpop.permute.xlu0 %894
    %s897 = sor.u32 256, 88
    %898 = vbcast.lane.b32.xlu0 %v735, %s897
    %v899 = vpop.permute.xlu0 %898
    %s901 = sor.u32 256, 80
    %902 = vbcast.lane.b32.xlu0 %v747, %s901
    %v903 = vpop.permute.xlu0 %902
    %s905 = sor.u32 256, 88
    %906 = vbcast.lane.b32.xlu0 %v747, %s905
    %v907 = vpop.permute.xlu0 %906
    %s909 = sor.u32 256, 80
    %910 = vbcast.lane.b32.xlu0 %v759, %s909
    %v911 = vpop.permute.xlu0 %910
    %s913 = sor.u32 256, 88
    %914 = vbcast.lane.b32.xlu0 %v759, %s913
    %v915 = vpop.permute.xlu0 %914
    %s917 = sor.u32 256, 80
    %918 = vbcast.lane.b32.xlu0 %v771, %s917
    %v919 = vpop.permute.xlu0 %918
    %s921 = sor.u32 256, 88
    %922 = vbcast.lane.b32.xlu0 %v771, %s921
    %v923 = vpop.permute.xlu0 %922
    %v924 = vsel %vm318, %v799, %v863
    %v925 = vsel %vm318, %v803, %v867
    %v926 = vsel %vm318, %v807, %v871
    %v927 = vsel %vm318, %v811, %v875
    %v928 = vsel %vm318, %v815, %v879
    %v929 = vsel %vm318, %v819, %v883
    %v930 = vsel %vm318, %v823, %v887
    %v931 = vsel %vm318, %v827, %v891
    %v932 = vsel %vm318, %v831, %v895
    %v933 = vsel %vm318, %v835, %v899
    %v934 = vsel %vm318, %v839, %v903
    %v935 = vsel %vm318, %v843, %v907
    %v936 = vsel %vm318, %v847, %v911
    %v937 = vsel %vm318, %v851, %v915
    %v938 = vsel %vm318, %v855, %v919
    %v939 = vsel %vm318, %v859, %v923
    %v941 = vcombine.high %v447, %v447
    %v943 = vunpack.c.l.s4 1966171168
    %v944 = vunpack.c.0.s8 %v943
    %v945 = vlaneseq
    %v946 = vshrl.u32 %v945, 7
    %v947 = vsub.s32 %v944, %v946
    %v948 = vrot.slane %v447, %v947
    %v950 = vunpack.c.l.s4 1966171168
    %v951 = vunpack.c.0.s8 %v950
    %v952 = vlaneseq
    %v953 = vshrl.u32 %v952, 7
    %v954 = vsub.s32 %v951, %v953
    %v955 = vrot.slane %v941, %v954
    %v956 = vcombine.high %v948, %v948
    %v957 = vcombine.high %v955, %v955
    %v959 = vunpack.c.l.s4 1966171168
    %v960 = vunpack.c.0.s8 %v959
    %v961 = vlaneseq
    %v962 = vshrl.u32 %v961, 7
    %v963 = vsub.s32 %v960, %v962
    %v964 = vrot.slane %v948, %v963
    %v966 = vunpack.c.l.s4 1966171168
    %v967 = vunpack.c.0.s8 %v966
    %v968 = vlaneseq
    %v969 = vshrl.u32 %v968, 7
    %v970 = vsub.s32 %v967, %v969
    %v971 = vrot.slane %v955, %v970
    %v973 = vunpack.c.l.s4 1966171168
    %v974 = vunpack.c.0.s8 %v973
    %v975 = vlaneseq
    %v976 = vshrl.u32 %v975, 7
    %v977 = vsub.s32 %v974, %v976
    %v978 = vrot.slane %v956, %v977
    %v980 = vunpack.c.l.s4 1966171168
    %v981 = vunpack.c.0.s8 %v980
    %v982 = vlaneseq
    %v983 = vshrl.u32 %v982, 7
    %v984 = vsub.s32 %v981, %v983
    %v985 = vrot.slane %v957, %v984
    %v986 = vcombine.high %v964, %v964
    %v987 = vcombine.high %v971, %v971
    %v988 = vcombine.high %v978, %v978
    %v989 = vcombine.high %v985, %v985
    %v990 = vlaneseq
    %v991 = vshrl.u32 %v990, 7
    %v992 = vsub.s32 0, %v991
    %v993 = vrot.slane %v964, %v992
    %v994 = vlaneseq
    %v995 = vshrl.u32 %v994, 7
    %v996 = vsub.s32 0, %v995
    %v997 = vrot.slane %v978, %v996
    %v998 = vlaneseq
    %v999 = vshrl.u32 %v998, 7
    %v1000 = vsub.s32 0, %v999
    %v1001 = vrot.slane %v986, %v1000
    %v1002 = vlaneseq
    %v1003 = vshrl.u32 %v1002, 7
    %v1004 = vsub.s32 0, %v1003
    %v1005 = vrot.slane %v988, %v1004
    %v1006 = vlaneseq
    %v1007 = vshrl.u32 %v1006, 7
    %v1008 = vsub.s32 0, %v1007
    %v1009 = vrot.slane %v971, %v1008
    %v1010 = vlaneseq
    %v1011 = vshrl.u32 %v1010, 7
    %v1012 = vsub.s32 0, %v1011
    %v1013 = vrot.slane %v985, %v1012
    %v1014 = vlaneseq
    %v1015 = vshrl.u32 %v1014, 7
    %v1016 = vsub.s32 0, %v1015
    %v1017 = vrot.slane %v987, %v1016
    %v1018 = vlaneseq
    %v1019 = vshrl.u32 %v1018, 7
    %v1020 = vsub.s32 0, %v1019
    %v1021 = vrot.slane %v989, %v1020
    %v1030 = vmul.f32 %v780, %v993
    %v1031 = vmul.f32 %v781, %v993
    %v1032 = vmul.f32 %v782, %v997
    %v1033 = vmul.f32 %v783, %v997
    %v1034 = vmul.f32 %v784, %v1001
    %v1035 = vmul.f32 %v785, %v1001
    %v1036 = vmul.f32 %v786, %v1005
    %v1037 = vmul.f32 %v787, %v1005
    %v1038 = vmul.f32 %v788, %v1009
    %v1039 = vmul.f32 %v789, %v1009
    %v1040 = vmul.f32 %v790, %v1013
    %v1041 = vmul.f32 %v791, %v1013
    %v1042 = vmul.f32 %v792, %v1017
    %v1043 = vmul.f32 %v793, %v1017
    %v1044 = vmul.f32 %v794, %v1021
    %v1045 = vmul.f32 %v795, %v1021
    %v1046 = vmul.f32 %v557, 0.0
    %v1047 = vmul.f32 %v559, 0.0
    %v1048 = vadd.f32 %v1046, %v1030
    %v1049 = vadd.f32 %v1047, %v1031
    %v1050 = vmul.f32 %v924, %v1048
    %v1051 = vmul.f32 %v925, %v1049
    %v1052 = vadd.f32 %v1050, %v1051
    %v1053 = vrot.slane %v1052, 4
    %v1054 = vadd.f32 %v1052, %v1053
    %v1055 = vrot.slane %v1054, 2
    %v1056 = vadd.f32 %v1054, %v1055
    %v1057 = vrot.slane %v1056, 1
    %v1058 = vadd.f32 %v1056, %v1057
    %v1059 = vmul.f32 %v561, %v1048
    %v1060 = vmul.f32 %v563, %v1049
    %v1061 = vadd.f32 %v1059, %v1032
    %v1062 = vadd.f32 %v1060, %v1033
    %v1063 = vmul.f32 %v926, %v1061
    %v1064 = vmul.f32 %v927, %v1062
    %v1065 = vadd.f32 %v1063, %v1064
    %v1066 = vrot.slane %v1065, 4
    %v1067 = vadd.f32 %v1065, %v1066
    %v1068 = vrot.slane %v1067, 2
    %v1069 = vadd.f32 %v1067, %v1068
    %v1070 = vrot.slane %v1069, 1
    %v1071 = vadd.f32 %v1069, %v1070
    %v1072 = vmul.f32 %v565, %v1061
    %v1073 = vmul.f32 %v567, %v1062
    %v1074 = vadd.f32 %v1072, %v1034
    %v1075 = vadd.f32 %v1073, %v1035
    %v1076 = vmul.f32 %v928, %v1074
    %v1077 = vmul.f32 %v929, %v1075
    %v1078 = vadd.f32 %v1076, %v1077
    %v1079 = vrot.slane %v1078, 4
    %v1080 = vadd.f32 %v1078, %v1079
    %v1081 = vrot.slane %v1080, 2
    %v1082 = vadd.f32 %v1080, %v1081
    %v1083 = vrot.slane %v1082, 1
    %v1084 = vadd.f32 %v1082, %v1083
    %v1085 = vmul.f32 %v569, %v1074
    %v1086 = vmul.f32 %v571, %v1075
    %v1087 = vadd.f32 %v1085, %v1036
    %v1088 = vadd.f32 %v1086, %v1037
    %v1089 = vmul.f32 %v930, %v1087
    %v1090 = vmul.f32 %v931, %v1088
    %v1091 = vadd.f32 %v1089, %v1090
    %v1092 = vrot.slane %v1091, 4
    %v1093 = vadd.f32 %v1091, %v1092
    %v1094 = vrot.slane %v1093, 2
    %v1095 = vadd.f32 %v1093, %v1094
    %v1096 = vrot.slane %v1095, 1
    %v1097 = vadd.f32 %v1095, %v1096
    %v1098 = vmul.f32 %v573, %v1087
    %v1099 = vmul.f32 %v575, %v1088
    %v1100 = vadd.f32 %v1098, %v1038
    %v1101 = vadd.f32 %v1099, %v1039
    %v1102 = vmul.f32 %v932, %v1100
    %v1103 = vmul.f32 %v933, %v1101
    %v1104 = vadd.f32 %v1102, %v1103
    %v1105 = vrot.slane %v1104, 4
    %v1106 = vadd.f32 %v1104, %v1105
    %v1107 = vrot.slane %v1106, 2
    %v1108 = vadd.f32 %v1106, %v1107
    %v1109 = vrot.slane %v1108, 1
    %v1110 = vadd.f32 %v1108, %v1109
    %v1111 = vmul.f32 %v577, %v1100
    %v1112 = vmul.f32 %v579, %v1101
    %v1113 = vadd.f32 %v1111, %v1040
    %v1114 = vadd.f32 %v1112, %v1041
    %v1115 = vmul.f32 %v934, %v1113
    %v1116 = vmul.f32 %v935, %v1114
    %v1117 = vadd.f32 %v1115, %v1116
    %v1118 = vrot.slane %v1117, 4
    %v1119 = vadd.f32 %v1117, %v1118
    %v1120 = vrot.slane %v1119, 2
    %v1121 = vadd.f32 %v1119, %v1120
    %v1122 = vrot.slane %v1121, 1
    %v1123 = vadd.f32 %v1121, %v1122
    %v1124 = vmul.f32 %v581, %v1113
    %v1125 = vmul.f32 %v583, %v1114
    %v1126 = vadd.f32 %v1124, %v1042
    %v1127 = vadd.f32 %v1125, %v1043
    %v1128 = vmul.f32 %v936, %v1126
    %v1129 = vmul.f32 %v937, %v1127
    %v1130 = vadd.f32 %v1128, %v1129
    %v1131 = vrot.slane %v1130, 4
    %v1132 = vadd.f32 %v1130, %v1131
    %v1133 = vrot.slane %v1132, 2
    %v1134 = vadd.f32 %v1132, %v1133
    %v1135 = vrot.slane %v1134, 1
    %v1136 = vadd.f32 %v1134, %v1135
    %v1137 = vmul.f32 %v585, %v1126
    %v1138 = vmul.f32 %v587, %v1127
    %v1139 = vadd.f32 %v1137, %v1044
    %v1140 = vadd.f32 %v1138, %v1045
    %v1141 = vmul.f32 %v938, %v1139
    %v1142 = vmul.f32 %v939, %v1140
    %v1143 = vadd.f32 %v1141, %v1142
    %v1144 = vrot.slane %v1143, 4
    %v1145 = vadd.f32 %v1143, %v1144
    %v1146 = vrot.slane %v1145, 2
    %v1147 = vadd.f32 %v1145, %v1146
    %v1148 = vrot.slane %v1147, 1
    %v1149 = vadd.f32 %v1147, %v1148
    %v1150 = vsel %vm239, %v1058, %v1071
    %v1151 = vsel %vm258, %v1150, %v1084
    %v1152 = vsel %vm277, %v1151, %v1097
    %vm1153 = vcmask 1043456
    %v1154 = vsel %vm1153, %v1152, %v1110
    %vm1155 = vcmask 1044480
    %v1156 = vsel %vm1155, %v1154, %v1123
    %vm1157 = vcmask 1045504
    %v1158 = vsel %vm1157, %v1156, %v1136
    %vm1159 = vcmask 1046528
    %v1160 = vsel %vm1159, %v1158, %v1149
    %1162 = vrot.lane.b32.xlu0 %v1160, 64
    %v1163 = vpop.permute.xlu0 %1162
    %v1165 = vlaneseq
    %v1166 = vshrl.u32 %v1165, 7
    %v1167 = vsub.s32 2, %v1166
    %v1168 = vrot.slane %v109, %v1167
    %v1169 = vmul.f32 %v1168, %v308
    %v1170 = vmul.f32 %v1168, %v309
    %v1171 = vadd.f32 %v1160, %v1169
    %v1172 = vadd.f32 %v1163, %v1170
    %v1173 = vxor.u32 %v209, 2147483648
    %v1174 = vxor.u32 %v215, 2147483648
    %v1175 = vmul.f32 %v1173, 1.442695
    %v1176 = vpow.pop %v1175
    %v1177 = vmul.f32 %v1174, 1.442695
    %v1178 = vpow.pop %v1177
    %v1179 = vadd.f32 %v1176, 1.0
    %v1180 = vadd.f32 %v1178, 1.0
    %v1181 = vrcp.pop %v1179
    %v1182 = vmul.f32 1.0, %v1181
    %v1183 = vrcp.pop %v1180
    %v1184 = vmul.f32 1.0, %v1183
    %v1185 = vmul.f32 %v209, %v1182
    %v1186 = vmul.f32 %v215, %v1184
    %1189 = vrot.lane.b32.xlu0 %v1185, 64
    %v1190 = vpop.permute.xlu0 %1189
    %1191 = vrot.lane.b32.xlu0 %v1186, 64
    %v1192 = vpop.permute.xlu0 %1191
    %v1195 = vmul.f32 %v1171, %v1190
    %v1196 = vmul.f32 %v1172, %v1192
    %v1197 = vld [vmem:[#allocation11] sm:$0xff]
    %v1198 = vld [vmem:[#allocation11 + $0x8] sm:$0xff]
    %v1199 = vld [vmem:[#allocation11 + $0x10] sm:$0xff]
    %v1200 = vld [vmem:[#allocation11 + $0x18] sm:$0xff]
    %v1201 = vld [vmem:[#allocation11 + $0x20] sm:$0xff]
    %v1202 = vld [vmem:[#allocation11 + $0x28] sm:$0xff]
    %v1203 = vld [vmem:[#allocation11 + $0x30] sm:$0xff]
    %v1204 = vld [vmem:[#allocation11 + $0x38] sm:$0xff]
    %v1206 = vsel %vm318, %v1195, 0
    %v1209 = vsel %vm318, %v1196, 0
    %1211 = vmatprep.subr.mxu0 0.0
    %1212 = vmatpush1.msra.mxu0 0.0
    %1213 = vmatprep.subr.mxu0 0.0
    %1214 = vmatpush1.msra.mxu0 0.0
    %1215 = vmatprep.subr.mxu0 0.0
    %1216 = vmatpush1.msra.mxu0 0.0
    %1217 = vmatprep.subr.mxu0 0.0
    %1218 = vmatpush1.msra.mxu0 0.0
    %1219 = vmatprep.subr.mxu0 0.0
    %1220 = vmatpush1.msra.mxu0 0.0
    %1221 = vmatprep.subr.mxu0 0.0
    %1222 = vmatpush1.msra.mxu0 0.0
    %1223 = vmatprep.subr.mxu0 0.0
    %1224 = vmatpush1.msra.mxu0 0.0
    %1225 = vmatprep.subr.mxu0 0.0
    %1226 = vmatpush1.msra.mxu0 0.0
    %1227 = vmatprep.subr.mxu0 0.0
    %1228 = vmatpush1.msra.mxu0 %v1204
    %1229 = vmatprep.subr.mxu0 0.0
    %1230 = vmatpush1.msra.mxu0 %v1203
    %1231 = vmatprep.subr.mxu0 0.0
    %1232 = vmatpush1.msra.mxu0 %v1202
    %1233 = vmatprep.subr.mxu0 0.0
    %1234 = vmatpush1.msra.mxu0 %v1201
    %1235 = vmatprep.subr.mxu0 0.0
    %1236 = vmatpush1.msra.mxu0 %v1200
    %1237 = vmatprep.subr.mxu0 0.0
    %1238 = vmatpush1.msra.mxu0 %v1199
    %1239 = vmatprep.subr.mxu0 0.0
    %1240 = vmatpush1.msra.mxu0 %v1198
    %1241 = vmatprep.subr.mxu0 0.0
    %1242 = vmatpush1.msra.mxu0 %v1197
    %1243 = vmatprep.subr.mxu0 0.0
    %1244 = vmatpush2.msra.mxu0 0.0
    %1245 = vmatprep.subr.mxu0 0.0
    %1246 = vmatpush2.msra.mxu0 0.0
    %1247 = vmatprep.subr.mxu0 0.0
    %1248 = vmatpush2.msra.mxu0 0.0
    %1249 = vmatprep.subr.mxu0 0.0
    %1250 = vmatpush2.msra.mxu0 0.0
    %1251 = vmatprep.subr.mxu0 0.0
    %1252 = vmatpush2.msra.mxu0 0.0
    %1253 = vmatprep.subr.mxu0 0.0
    %1254 = vmatpush2.msra.mxu0 0.0
    %1255 = vmatprep.subr.mxu0 0.0
    %1256 = vmatpush2.msra.mxu0 0.0
    %1257 = vmatprep.subr.mxu0 0.0
    %1258 = vmatpush2.msra.mxu0 0.0
    %1259 = vmatprep.subr.mxu0 0.0
    %1260 = vmatpush2.msra.mxu0 0.0
    %1261 = vmatprep.subr.mxu0 0.0
    %1262 = vmatpush2.msra.mxu0 0.0
    %1263 = vmatprep.subr.mxu0 0.0
    %1264 = vmatpush2.msra.mxu0 0.0
    %1265 = vmatprep.subr.mxu0 0.0
    %1266 = vmatpush2.msra.mxu0 0.0
    %1267 = vmatprep.subr.mxu0 0.0
    %1268 = vmatpush2.msra.mxu0 0.0
    %1269 = vmatprep.subr.mxu0 0.0
    %1270 = vmatpush2.msra.mxu0 0.0
    %1271 = vmatprep.subr.mxu0 0.0
    %1272 = vmatpush2.msra.mxu0 0.0
    %1273 = vmatprep.subr.mxu0 0.0
    %1274 = vmatpush2.msra.mxu0 0.0
    %1275 = vmatprep.mubr.f32.mxu0 0.0
    %1276 = vmatmul.mubr.f32.gmra.mxu0 %v1206
    %v1277 = vpop.f32.mrf.mxu0
    %v1278 = vadd.f32 0.0, %v1277
    %v1279 = vpop.f32.mrf.mxu0
    %1280 = vmatprep.mubr.f32.mxu0 0.0
    %1281 = vmatmul.mubr.f32.gmra.mxu0 %v1209
    %v1282 = vpop.f32.mrf.mxu0
    %v1283 = vadd.f32 0.0, %v1282
    %v1284 = vpop.f32.mrf.mxu0
    %1285 = vdwg.mxu0
    %v1286 = vlaneseq
    %v1287 = vshrl.u32 %v1286, 7
    %v1288 = vsub.s32 3, %v1287
    %v1289 = vrot.slane %v109, %v1288
    %v1290 = vadd.f32 %v211, %v1289
    %v1291 = vadd.f32 %v217, %v1289
    %v1292 = vxor.u32 %v1290, 2147483648
    %v1293 = vxor.u32 %v1291, 2147483648
    %v1294 = vmul.f32 %v1292, 1.442695
    %v1295 = vpow.pop %v1294
    %v1296 = vmul.f32 %v1293, 1.442695
    %v1297 = vpow.pop %v1296
    %v1298 = vadd.f32 %v1295, 1.0
    %v1299 = vadd.f32 %v1297, 1.0
    %v1300 = vrcp.pop %v1298
    %v1301 = vmul.f32 1.0, %v1300
    %v1302 = vrcp.pop %v1299
    %v1303 = vmul.f32 1.0, %v1302
    %v1304 = vmul.f32 %v1301, %v107
    %v1305 = vmul.f32 %v1303, %v108
    %v1306 = vsub.f32 1.0, %v1301
    %v1307 = vsub.f32 1.0, %v1303
    %v1308 = vmul.f32 %v1306, %v1278
    %v1309 = vmul.f32 %v1307, %v1283
    %v1310 = vadd.f32 %v1304, %v1308
    %v1311 = vadd.f32 %v1305, %v1309
    %1312 = vst [vmem:[#allocation13] sm:$0xff] %v1310
    %1313 = vst [vmem:[#allocation13 + $0x8] sm:$0xff] %v1311
    // Predicated region
    $region54: #{tpu_custom_call.1} parent=1 // pred_check
      _
    $region55: #{tpu_custom_call.1} parent=1 // pred_check_branch
      %1315 = sbr.rel (0) target = $region57
    $region56: #{tpu_custom_call.1} parent=1 // pred_region
      %s1317 = ssub.s32 256, 256
      %1318 = vsyncadd [#allocation4], %s1317
      %s1319 = sshll.u32 [#allocation13], 4
      %s1320 = int_to_ptr.vmem [resolvable:$true] %s1319
      %1325 = dma.vmem_to_hbm [thread:$0]  %s1320, 256, %s7, [#allocation4], 128, 128, 8
    $region57: #{tpu_custom_call.1} parent=1 // pred_fallthru
      _
    // Predicated region
    $region58: #{tpu_custom_call.1} parent=1 // pred_check
      _
    $region59: #{tpu_custom_call.1} parent=1 // pred_check_branch
      %1327 = sbr.rel (0) target = $region61
    $region60: #{tpu_custom_call.1} parent=1 // pred_region
      %1328 = dma.done [#allocation4], 256
    $region61: #{tpu_custom_call.1} parent=1 // pred_fallthru
      _
    %1329 = vsyncpa [#allocation3], 1
    %1330 = vsyncpa [#allocation6], 1
    %1331 = vsyncpa [#allocation9], 1
    %1332 = vsyncpa [#allocation12], 1
    %1333 = vsyncpa [#allocation4], 1

</llo_original>
